<compile_context>
chip_gen: v7x
topology: tpu7x:2x2x1
jax: 0.10.0
libtpu: 0.0.40
codegen_flags: <defaults>
</compile_context>

<pallas_src>
import functools

import jax
import jax.numpy as jnp
from jax import lax
from jax.experimental import pallas as pl
from jax.experimental.pallas import tpu as pltpu


def _round_up(x, m):
    return ((x + m - 1) // m) * m


def _edge_key_kernel(row_ref, col_ref, key_ref, *, cutoff_sq, n_pad, tm, tn):
    # Row slab tile (tm, 4): columns [x, y, z, batch]; col slab tile (4, tn).
    xi = row_ref[:, 0:1]
    yi = row_ref[:, 1:2]
    zi = row_ref[:, 2:3]
    bi = row_ref[:, 3:4]
    xj = col_ref[0:1, :]
    yj = col_ref[1:2, :]
    zj = col_ref[2:3, :]
    bj = col_ref[3:4, :]

    dx = xi - xj
    dy = yi - yj
    dz = zi - zj
    d2 = dx * dx + dy * dy + dz * dz                      # direct VPU form

    edge = (bi == bj) & (d2 <= jnp.float32(cutoff_sq))

    i0 = pl.program_id(0) * tm
    j0 = pl.program_id(1) * tn
    # Descending selection key: n_pad - j for an edge, 0 for a non-edge.  Host
    # side lax.top_k then needs no negation pass; largest key == smallest j.
    keys = (n_pad - j0) - lax.broadcasted_iota(jnp.int32, (1, tn), 1)
    out_dtype = key_ref.dtype

    # The self-edge (i != j) mask only matters on tiles touching the diagonal.
    is_diag = (i0 < j0 + tn) & (j0 < i0 + tm)

    @pl.when(is_diag)
    def _():
        rows = i0 + lax.broadcasted_iota(jnp.int32, (tm, 1), 0)
        cols = j0 + lax.broadcasted_iota(jnp.int32, (1, tn), 1)
        e = edge & (rows != cols)
        key_ref[...] = jnp.where(e, keys, 0).astype(out_dtype)

    @pl.when(jnp.logical_not(is_diag))
    def _():
        key_ref[...] = jnp.where(edge, keys, 0).astype(out_dtype)


def pairwise_edge_keys(pos, batch, cutoff):
    """(rows_pad, n_pad) key matrix: key[i, j] = n_pad - j if edge else 0."""
    n = pos.shape[0]
    n_pad = _round_up(max(n, 1), 512)        # lane-dense; no 128-tile fallback
    tm = 256
    tn = 1024 if n_pad % 1024 == 0 else 512  # wide lane dim, unmasked vst
    rows_pad = _round_up(max(n, 1), tm)      # only compute rows we keep

    # int16 halves the N^2 writeback and top_k's re-read; guard the range.
    out_dtype = jnp.int16 if n_pad < 32768 else jnp.int32

    pos_f = pos.astype(jnp.float32)
    b_f = batch.astype(jnp.float32)          # exact for molecule ids << 2^24

    # Packed slabs: one DMA stream per side instead of 8 lane-sparse ones.
    # Padded atoms carry batch id -1 so they never pair with real atoms.
    row_slab = jnp.zeros((rows_pad, 4), jnp.float32).at[:, 3].set(-1.0)
    row_slab = row_slab.at[:n, :3].set(pos_f).at[:n, 3].set(b_f)
    col_slab = jnp.zeros((4, n_pad), jnp.float32).at[3, :].set(-1.0)
    col_slab = col_slab.at[:3, :n].set(pos_f.T).at[3, :n].set(b_f)

    kernel = functools.partial(
        _edge_key_kernel,
        cutoff_sq=float(cutoff) ** 2, n_pad=n_pad, tm=tm, tn=tn)

    key = pl.pallas_call(
        kernel,
        out_shape=jax.ShapeDtypeStruct((rows_pad, n_pad), out_dtype),
        # j innermost: the row-slab block index is constant across the inner
        # axis, so it is not re-DMA'd.
        grid=(rows_pad // tm, n_pad // tn),
        in_specs=[pl.BlockSpec((tm, 4), lambda i, j: (i, 0)),
                  pl.BlockSpec((4, tn), lambda i, j: (0, j))],
        out_specs=pl.BlockSpec((tm, tn), lambda i, j: (i, j)),
        compiler_params=pltpu.CompilerParams(
            dimension_semantics=("parallel", "parallel"),   # megacore on v7x
            vmem_limit_bytes=32 * 1024 * 1024),
    )(row_slab, col_slab)
    return key, n_pad


@functools.partial(jax.jit, static_argnames=("cutoff", "max_num_neighbors"))
def radius_interaction_graph(pos, batch, cutoff=10.0, max_num_neighbors=32):
    """Forward pass of RadiusInteractionGraph.

    Returns:
      edge_index:  int32 (2, N*K)  -- [source j, target i], padded with -1.
      edge_weight: float32 (N*K,)  -- ||pos[i] - pos[j]||, padded with 0.
      num_edges:   int32 scalar    -- number of valid (non-padded) edges.
    """
    # TODO(synk): radius_graph's dynamic edge count has no static-shape
    # equivalent on TPU; we return a padded edge list + valid-edge count.
    n = pos.shape[0]
    k = int(min(max_num_neighbors, n))

    key, n_pad = pairwise_edge_keys(pos, batch, cutoff)
    key = key[:n]                                            # (n, n_pad)

    # Per target node i keep the first k in-cutoff neighbors in source-index
    # order (torch_cluster's max_num_neighbors cap).  Keys are emitted in
    # descending form (n_pad - j for edges, 0 for non-edges), so top_k applies
    # directly: largest keys == smallest source indices, non-edges sort last.
    vals, _ = lax.top_k(key, k)                              # (n, k) descending
    vals = vals.astype(jnp.int32)
    valid = vals > 0                                         # edges have key >= 1
    nbr = jnp.where(valid, jnp.int32(n_pad) - vals, 0)       # safe gather idx

    # Edge weights from gathered positions: N*K sqrt, never N^2.
    pos_f = pos.astype(jnp.float32)
    diff = pos_f[:, None, :] - pos_f[nbr]                    # (n, k, 3)
    w = jnp.sqrt(jnp.sum(diff * diff, axis=-1))              # (n, k)

    tgt = jnp.broadcast_to(jnp.arange(n, dtype=jnp.int32)[:, None], (n, k))

    # Stable compaction of valid edges to the front via cumsum + scatter
    # (O(N*K); no full argsort).
    v = valid.reshape(-1)
    total = n * k
    dest = jnp.where(v, jnp.cumsum(v.astype(jnp.int32)) - 1, total)  # OOB drop
    edge_src = jnp.full((total,), -1, jnp.int32).at[dest].set(
        nbr.reshape(-1), mode="drop")
    edge_tgt = jnp.full((total,), -1, jnp.int32).at[dest].set(
        tgt.reshape(-1), mode="drop")
    edge_weight = jnp.zeros((total,), jnp.float32).at[dest].set(
        jnp.where(v, w.reshape(-1), 0.0), mode="drop")

    edge_index = jnp.stack([edge_src, edge_tgt])             # [source, target]
    num_edges = jnp.sum(v).astype(jnp.int32)
    return edge_index, edge_weight, num_edges


if __name__ == "__main__":
    rng = jax.random.PRNGKey(0)
    n = 16                                    # two molecules of 8 atoms each
    pos = jax.random.uniform(rng, (n, 3), jnp.float32) * 4.0
    batch = jnp.array([0] * 8 + [1] * 8, dtype=jnp.int32)
    cutoff = 3.0
    max_num_neighbors = 8

    edge_index, edge_weight, num_edges = radius_interaction_graph(
        pos, batch, cutoff=cutoff, max_num_neighbors=max_num_neighbors)
    jax.block_until_ready((edge_index, edge_weight, num_edges))

    # --- pure-JAX reference (direct formulation) ---
    diff = pos[:, None, :] - pos[None, :, :]
    ref_d2 = jnp.sum(diff * diff, axis=-1)
    ref_dist = jnp.sqrt(ref_d2)
    ref_adj = ((batch[:, None] == batch[None, :])
               & (~jnp.eye(n, dtype=bool))
               & (ref_d2 <= cutoff * cutoff))

    ne = int(num_edges)
    src = edge_index[0, :ne]
    tgt = edge_index[1, :ne]

    # Every emitted edge is same-molecule, non-self, within cutoff.
    assert bool(jnp.all(batch[src] == batch[tgt])), "cross-molecule edge"
    assert bool(jnp.all(src != tgt)), "self edge"
    assert bool(jnp.all(ref_dist[tgt, src] <= cutoff + 1e-4)), "edge beyond cutoff"
    # Edge weights match reference distances.
    assert jnp.allclose(edge_weight[:ne], ref_dist[tgt, src], atol=1e-4), \
        "edge weight mismatch"
    # Padding is clean.
    assert bool(jnp.all(edge_index[:, ne:] == -1))
    assert bool(jnp.all(edge_weight[ne:] == 0.0))

    # Molecules have 8 atoms and max_num_neighbors=8, so the neighbor cap never
    # binds: the edge set must match the reference (up to cutoff-boundary ulps).
    adj_out = jnp.zeros((n, n), bool).at[tgt, src].set(True)
    disagree = adj_out != ref_adj
    near_boundary = jnp.abs(ref_dist - cutoff) <= 1e-4
    assert bool(jnp.all(~disagree | near_boundary)), "edge set mismatch"

    print("KERNEL_OK")
</pallas_src>

<mosaic_0001>
module attributes {stable_mosaic.version = 11 : i64} {
  func.func @_edge_key_kernel(%arg0: i32, %arg1: i32, %arg2: memref<256x4xf32, #tpu.memory_space<vmem>>, %arg3: memref<4x512xf32, #tpu.memory_space<vmem>>, %arg4: memref<256x512xi16, #tpu.memory_space<vmem>>) attributes {dimension_semantics = [#tpu.dimension_semantics<parallel>, #tpu.dimension_semantics<parallel>], iteration_bounds = array<i64: 1, 1>, scalar_prefetch = 0 : i64, scratch_operands = 0 : i64, tpu.core_type = #tpu.core_type<tc>, window_params = [{transform_indices = @transform_0, window_bounds = array<i64: 256, 4>}, {transform_indices = @transform_1, window_bounds = array<i64: 4, 512>}, {transform_indices = @transform_2, window_bounds = array<i64: 256, 512>}]} {
    %c0 = arith.constant 0 : index
    %c0_0 = arith.constant 0 : index
    %0 = vector.load %arg2[%c0, %c0_0] : memref<256x4xf32, #tpu.memory_space<vmem>>, vector<256x1xf32>
    %c0_1 = arith.constant 0 : index
    %c1 = arith.constant 1 : index
    %1 = vector.load %arg2[%c0_1, %c1] : memref<256x4xf32, #tpu.memory_space<vmem>>, vector<256x1xf32>
    %c0_2 = arith.constant 0 : index
    %c2 = arith.constant 2 : index
    %2 = vector.load %arg2[%c0_2, %c2] : memref<256x4xf32, #tpu.memory_space<vmem>>, vector<256x1xf32>
    %c0_3 = arith.constant 0 : index
    %c3 = arith.constant 3 : index
    %3 = vector.load %arg2[%c0_3, %c3] : memref<256x4xf32, #tpu.memory_space<vmem>>, vector<256x1xf32>
    %c0_4 = arith.constant 0 : index
    %c0_5 = arith.constant 0 : index
    %4 = vector.load %arg3[%c0_4, %c0_5] : memref<4x512xf32, #tpu.memory_space<vmem>>, vector<1x512xf32>
    %c1_6 = arith.constant 1 : index
    %c0_7 = arith.constant 0 : index
    %5 = vector.load %arg3[%c1_6, %c0_7] : memref<4x512xf32, #tpu.memory_space<vmem>>, vector<1x512xf32>
    %c2_8 = arith.constant 2 : index
    %c0_9 = arith.constant 0 : index
    %6 = vector.load %arg3[%c2_8, %c0_9] : memref<4x512xf32, #tpu.memory_space<vmem>>, vector<1x512xf32>
    %c3_10 = arith.constant 3 : index
    %c0_11 = arith.constant 0 : index
    %7 = vector.load %arg3[%c3_10, %c0_11] : memref<4x512xf32, #tpu.memory_space<vmem>>, vector<1x512xf32>
    %8 = vector.broadcast %0 : vector<256x1xf32> to vector<256x512xf32>
    %9 = vector.broadcast %4 : vector<1x512xf32> to vector<256x512xf32>
    %10 = arith.subf %8, %9 : vector<256x512xf32>
    %11 = vector.broadcast %1 : vector<256x1xf32> to vector<256x512xf32>
    %12 = vector.broadcast %5 : vector<1x512xf32> to vector<256x512xf32>
    %13 = arith.subf %11, %12 : vector<256x512xf32>
    %14 = vector.broadcast %2 : vector<256x1xf32> to vector<256x512xf32>
    %15 = vector.broadcast %6 : vector<1x512xf32> to vector<256x512xf32>
    %16 = arith.subf %14, %15 : vector<256x512xf32>
    %17 = arith.mulf %10, %10 : vector<256x512xf32>
    %18 = arith.mulf %13, %13 : vector<256x512xf32>
    %19 = arith.addf %17, %18 : vector<256x512xf32>
    %20 = arith.mulf %16, %16 : vector<256x512xf32>
    %21 = arith.addf %19, %20 : vector<256x512xf32>
    %22 = vector.broadcast %3 : vector<256x1xf32> to vector<256x512xf32>
    %23 = vector.broadcast %7 : vector<1x512xf32> to vector<256x512xf32>
    %24 = arith.cmpf oeq, %22, %23 : vector<256x512xf32>
    %cst = arith.constant 9.000000e+00 : f32
    %25 = vector.broadcast %cst : f32 to vector<256x512xf32>
    %26 = arith.cmpf ole, %21, %25 : vector<256x512xf32>
    %27 = arith.andi %24, %26 : vector<256x512xi1>
    %c256_i32 = arith.constant 256 : i32
    %28 = arith.muli %arg0, %c256_i32 : i32
    %c512_i32 = arith.constant 512 : i32
    %29 = arith.muli %arg1, %c512_i32 : i32
    %c512_i32_12 = arith.constant 512 : i32
    %30 = arith.subi %c512_i32_12, %29 : i32
    %31 = tpu.iota {dimensions = array<i32: 1>} : vector<1x512xi32>
    %32 = vector.broadcast %30 : i32 to vector<1x512xi32>
    %33 = arith.subi %32, %31 : vector<1x512xi32>
    %c512_i32_13 = arith.constant 512 : i32
    %34 = arith.addi %29, %c512_i32_13 : i32
    %35 = arith.cmpi slt, %28, %34 : i32
    %c256_i32_14 = arith.constant 256 : i32
    %36 = arith.addi %28, %c256_i32_14 : i32
    %37 = arith.cmpi slt, %29, %36 : i32
    %38 = arith.andi %35, %37 : i1
    %39 = arith.extui %38 : i1 to i32
    %c0_i32 = arith.constant 0 : i32
    %40 = arith.cmpi ne, %39, %c0_i32 : i32
    scf.if %40 {
      %44 = tpu.iota {dimensions = array<i32: 0>} : vector<256x1xi32>
      %45 = vector.broadcast %28 : i32 to vector<256x1xi32>
      %46 = arith.addi %45, %44 : vector<256x1xi32>
      %47 = tpu.iota {dimensions = array<i32: 1>} : vector<1x512xi32>
      %48 = vector.broadcast %29 : i32 to vector<1x512xi32>
      %49 = arith.addi %48, %47 : vector<1x512xi32>
      %50 = vector.broadcast %46 : vector<256x1xi32> to vector<256x512xi32>
      %51 = vector.broadcast %49 : vector<1x512xi32> to vector<256x512xi32>
      %52 = arith.cmpi ne, %50, %51 : vector<256x512xi32>
      %53 = arith.andi %27, %52 : vector<256x512xi1>
      %c0_i32_16 = arith.constant 0 : i32
      %54 = vector.shape_cast %33 : vector<1x512xi32> to vector<1x512xi32>
      %55 = vector.broadcast %54 : vector<1x512xi32> to vector<256x512xi32>
      %56 = vector.broadcast %c0_i32_16 : i32 to vector<256x512xi32>
      %57 = arith.select %53, %55, %56 : vector<256x512xi1>, vector<256x512xi32>
      %58 = arith.trunci %57 : vector<256x512xi32> to vector<256x512xi16>
      %c0_17 = arith.constant 0 : index
      %c0_18 = arith.constant 0 : index
      %59 = vector.load %arg4[%c0_17, %c0_18] : memref<256x512xi16, #tpu.memory_space<vmem>>, vector<256x512xi16>
      tpu.vector_store %arg4[%c0_17, %c0_18], %58 {strides = array<i32>} : memref<256x512xi16, #tpu.memory_space<vmem>>, vector<256x512xi16>,
    } else {
    }
    %true = arith.constant true
    %41 = arith.xori %38, %true : i1
    %42 = arith.extui %41 : i1 to i32
    %c0_i32_15 = arith.constant 0 : i32
    %43 = arith.cmpi ne, %42, %c0_i32_15 : i32
    scf.if %43 {
      %c0_i32_16 = arith.constant 0 : i32
      %44 = vector.shape_cast %33 : vector<1x512xi32> to vector<1x512xi32>
      %45 = vector.broadcast %44 : vector<1x512xi32> to vector<256x512xi32>
      %46 = vector.broadcast %c0_i32_16 : i32 to vector<256x512xi32>
      %47 = arith.select %27, %45, %46 : vector<256x512xi1>, vector<256x512xi32>
      %48 = arith.trunci %47 : vector<256x512xi32> to vector<256x512xi16>
      %c0_17 = arith.constant 0 : index
      %c0_18 = arith.constant 0 : index
      %49 = vector.load %arg4[%c0_17, %c0_18] : memref<256x512xi16, #tpu.memory_space<vmem>>, vector<256x512xi16>
      tpu.vector_store %arg4[%c0_17, %c0_18], %48 {strides = array<i32>} : memref<256x512xi16, #tpu.memory_space<vmem>>, vector<256x512xi16>,
    } else {
    }
    return
  }
  func.func @transform_0(%arg0: i32, %arg1: i32) -> (i32, i32) {
    %c0_i32 = arith.constant 0 : i32
    %c0_i32_0 = arith.constant 0 : i32
    return %arg0, %c0_i32 : i32, i32
  }
  func.func @transform_1(%arg0: i32, %arg1: i32) -> (i32, i32) {
    %c0_i32 = arith.constant 0 : i32
    %c0_i32_0 = arith.constant 0 : i32
    return %c0_i32, %arg1 : i32, i32
  }
  func.func @transform_2(%arg0: i32, %arg1: i32) -> (i32, i32) {
    %c0_i32 = arith.constant 0 : i32
    return %arg0, %arg1 : i32, i32
  }
}

</mosaic_0001>

<llo_original>
// kernel: radius_interaction_graph.1
$region0: #{radius_interaction_graph.1}
  #allocation0 [shape = 'u32[]', space=smem, size = 0x4, offset = 0x4, fixed_abs, tag = 'smem constant byte address 0x4 - core index']
  #allocation1 [shape = 'u32[144,128]{1,0:T(1,128)}', space=vmem, size = 0x12000, scoped, tag = 'internal scratch']
  %s0 = inlined_call_operand.vmem [shape: f32[256,4], index: 0, kind: input, shape index: {}]
  %s1 = inlined_call_operand.vmem [shape: f32[4,512], index: 1, kind: input, shape index: {}]
  %s2 = inlined_call_operand.vmem [shape: s16[256,512], index: 2, kind: output, shape index: {}]
  %s3 = sld [smem:[#allocation0]]
  $region26: #{radius_interaction_graph.1} parent=0
    _
  %s5 = ssub.s32 1, %s3
  %s6 = scalar_select 0, %s5, %s3
  // Predicated region
  $region2: #{radius_interaction_graph.1} parent=0 // pred_check
    _
  $region3: #{radius_interaction_graph.1} parent=0 // pred_check_branch
    %8 = sbr.rel (0) target = $region5
  $region4: #{radius_interaction_graph.1} parent=0 // pred_region
    _
  $region5: #{radius_interaction_graph.1} parent=0 // pred_fallthru
    _
  // Predicated region
  $region6: #{radius_interaction_graph.1} parent=0 // pred_check
    _
  $region7: #{radius_interaction_graph.1} parent=0 // pred_check_branch
    %10 = sbr.rel (0) target = $region9
  $region8: #{radius_interaction_graph.1} parent=0 // pred_region
    _
  $region9: #{radius_interaction_graph.1} parent=0 // pred_fallthru
    _
  %v11 = vld [vmem:[%s0] sm:$0xff]
  %v12 = vld [vmem:[%s0 + $0x8] sm:$0xff]
  %v13 = vld [vmem:[%s0 + $0x10] sm:$0xff]
  %v14 = vld [vmem:[%s0 + $0x18] sm:$0xff]
  %v15 = vld [vmem:[%s0 + $0x20] sm:$0xff]
  %v16 = vld [vmem:[%s0 + $0x28] sm:$0xff]
  %v17 = vld [vmem:[%s0 + $0x30] sm:$0xff]
  %v18 = vld [vmem:[%s0 + $0x38] sm:$0xff]
  %v19 = vld [vmem:[%s0 + $0x40] sm:$0xff]
  %v20 = vld [vmem:[%s0 + $0x48] sm:$0xff]
  %v21 = vld [vmem:[%s0 + $0x50] sm:$0xff]
  %v22 = vld [vmem:[%s0 + $0x58] sm:$0xff]
  %v23 = vld [vmem:[%s0 + $0x60] sm:$0xff]
  %v24 = vld [vmem:[%s0 + $0x68] sm:$0xff]
  %v25 = vld [vmem:[%s0 + $0x70] sm:$0xff]
  %v26 = vld [vmem:[%s0 + $0x78] sm:$0xff]
  %v27 = vld [vmem:[%s0 + $0x80] sm:$0xff]
  %v28 = vld [vmem:[%s0 + $0x88] sm:$0xff]
  %v29 = vld [vmem:[%s0 + $0x90] sm:$0xff]
  %v30 = vld [vmem:[%s0 + $0x98] sm:$0xff]
  %v31 = vld [vmem:[%s0 + $0xa0] sm:$0xff]
  %v32 = vld [vmem:[%s0 + $0xa8] sm:$0xff]
  %v33 = vld [vmem:[%s0 + $0xb0] sm:$0xff]
  %v34 = vld [vmem:[%s0 + $0xb8] sm:$0xff]
  %v35 = vld [vmem:[%s0 + $0xc0] sm:$0xff]
  %v36 = vld [vmem:[%s0 + $0xc8] sm:$0xff]
  %v37 = vld [vmem:[%s0 + $0xd0] sm:$0xff]
  %v38 = vld [vmem:[%s0 + $0xd8] sm:$0xff]
  %v39 = vld [vmem:[%s0 + $0xe0] sm:$0xff]
  %v40 = vld [vmem:[%s0 + $0xe8] sm:$0xff]
  %v41 = vld [vmem:[%s0 + $0xf0] sm:$0xff]
  %v42 = vld [vmem:[%s0 + $0xf8] sm:$0xff]
  %v43 = vld [vmem:[%s1] ss:$4 sm:$0xf]
  %s44 = scalar_lea.vmem %s1, 1
  %v45 = vld [vmem:[%s44] ss:$4 sm:$0xf]
  %s46 = scalar_lea.vmem %s1, 2
  %v47 = vld [vmem:[%s46] ss:$4 sm:$0xf]
  %s48 = scalar_lea.vmem %s1, 3
  %v49 = vld [vmem:[%s48] ss:$4 sm:$0xf]
  %51 = vset.pattern.permute.xlu0 0
  %52 = vperm.xlu0 %51, %v11
  %v53 = vpop.permute.xlu0 %52
  %56 = vset.pattern.permute.xlu0 0
  %57 = vperm.xlu0 %56, %v12
  %v58 = vpop.permute.xlu0 %57
  %61 = vset.pattern.permute.xlu0 0
  %62 = vperm.xlu0 %61, %v13
  %v63 = vpop.permute.xlu0 %62
  %66 = vset.pattern.permute.xlu0 0
  %67 = vperm.xlu0 %66, %v14
  %v68 = vpop.permute.xlu0 %67
  %71 = vset.pattern.permute.xlu0 0
  %72 = vperm.xlu0 %71, %v15
  %v73 = vpop.permute.xlu0 %72
  %76 = vset.pattern.permute.xlu0 0
  %77 = vperm.xlu0 %76, %v16
  %v78 = vpop.permute.xlu0 %77
  %81 = vset.pattern.permute.xlu0 0
  %82 = vperm.xlu0 %81, %v17
  %v83 = vpop.permute.xlu0 %82
  %86 = vset.pattern.permute.xlu0 0
  %87 = vperm.xlu0 %86, %v18
  %v88 = vpop.permute.xlu0 %87
  %91 = vset.pattern.permute.xlu0 0
  %92 = vperm.xlu0 %91, %v19
  %v93 = vpop.permute.xlu0 %92
  %96 = vset.pattern.permute.xlu0 0
  %97 = vperm.xlu0 %96, %v20
  %v98 = vpop.permute.xlu0 %97
  %101 = vset.pattern.permute.xlu0 0
  %102 = vperm.xlu0 %101, %v21
  %v103 = vpop.permute.xlu0 %102
  %106 = vset.pattern.permute.xlu0 0
  %107 = vperm.xlu0 %106, %v22
  %v108 = vpop.permute.xlu0 %107
  %111 = vset.pattern.permute.xlu0 0
  %112 = vperm.xlu0 %111, %v23
  %v113 = vpop.permute.xlu0 %112
  %116 = vset.pattern.permute.xlu0 0
  %117 = vperm.xlu0 %116, %v24
  %v118 = vpop.permute.xlu0 %117
  %121 = vset.pattern.permute.xlu0 0
  %122 = vperm.xlu0 %121, %v25
  %v123 = vpop.permute.xlu0 %122
  %126 = vset.pattern.permute.xlu0 0
  %127 = vperm.xlu0 %126, %v26
  %v128 = vpop.permute.xlu0 %127
  %131 = vset.pattern.permute.xlu0 0
  %132 = vperm.xlu0 %131, %v27
  %v133 = vpop.permute.xlu0 %132
  %136 = vset.pattern.permute.xlu0 0
  %137 = vperm.xlu0 %136, %v28
  %v138 = vpop.permute.xlu0 %137
  %141 = vset.pattern.permute.xlu0 0
  %142 = vperm.xlu0 %141, %v29
  %v143 = vpop.permute.xlu0 %142
  %146 = vset.pattern.permute.xlu0 0
  %147 = vperm.xlu0 %146, %v30
  %v148 = vpop.permute.xlu0 %147
  %151 = vset.pattern.permute.xlu0 0
  %152 = vperm.xlu0 %151, %v31
  %v153 = vpop.permute.xlu0 %152
  %156 = vset.pattern.permute.xlu0 0
  %157 = vperm.xlu0 %156, %v32
  %v158 = vpop.permute.xlu0 %157
  %161 = vset.pattern.permute.xlu0 0
  %162 = vperm.xlu0 %161, %v33
  %v163 = vpop.permute.xlu0 %162
  %166 = vset.pattern.permute.xlu0 0
  %167 = vperm.xlu0 %166, %v34
  %v168 = vpop.permute.xlu0 %167
  %171 = vset.pattern.permute.xlu0 0
  %172 = vperm.xlu0 %171, %v35
  %v173 = vpop.permute.xlu0 %172
  %176 = vset.pattern.permute.xlu0 0
  %177 = vperm.xlu0 %176, %v36
  %v178 = vpop.permute.xlu0 %177
  %181 = vset.pattern.permute.xlu0 0
  %182 = vperm.xlu0 %181, %v37
  %v183 = vpop.permute.xlu0 %182
  %186 = vset.pattern.permute.xlu0 0
  %187 = vperm.xlu0 %186, %v38
  %v188 = vpop.permute.xlu0 %187
  %191 = vset.pattern.permute.xlu0 0
  %192 = vperm.xlu0 %191, %v39
  %v193 = vpop.permute.xlu0 %192
  %196 = vset.pattern.permute.xlu0 0
  %197 = vperm.xlu0 %196, %v40
  %v198 = vpop.permute.xlu0 %197
  %201 = vset.pattern.permute.xlu0 0
  %202 = vperm.xlu0 %201, %v41
  %v203 = vpop.permute.xlu0 %202
  %206 = vset.pattern.permute.xlu0 0
  %207 = vperm.xlu0 %206, %v42
  %v208 = vpop.permute.xlu0 %207
  %v211 = vlaneseq
  %v212 = vshrl.u32 %v211, 7
  %v213 = vsub.s32 0, %v212
  %v214 = vrot.slane %v43, %v213
  %v215 = vlaneseq
  %v216 = vshrl.u32 %v215, 7
  %v217 = vsub.s32 1, %v216
  %v218 = vrot.slane %v43, %v217
  %v219 = vlaneseq
  %v220 = vshrl.u32 %v219, 7
  %v221 = vsub.s32 2, %v220
  %v222 = vrot.slane %v43, %v221
  %v223 = vlaneseq
  %v224 = vshrl.u32 %v223, 7
  %v225 = vsub.s32 3, %v224
  %v226 = vrot.slane %v43, %v225
  %v231 = vsub.f32 %v53, %v214
  %v232 = vsub.f32 %v53, %v218
  %v233 = vsub.f32 %v53, %v222
  %v234 = vsub.f32 %v53, %v226
  %v235 = vsub.f32 %v58, %v214
  %v236 = vsub.f32 %v58, %v218
  %v237 = vsub.f32 %v58, %v222
  %v238 = vsub.f32 %v58, %v226
  %v239 = vsub.f32 %v63, %v214
  %v240 = vsub.f32 %v63, %v218
  %v241 = vsub.f32 %v63, %v222
  %v242 = vsub.f32 %v63, %v226
  %v243 = vsub.f32 %v68, %v214
  %v244 = vsub.f32 %v68, %v218
  %v245 = vsub.f32 %v68, %v222
  %v246 = vsub.f32 %v68, %v226
  %v247 = vsub.f32 %v73, %v214
  %v248 = vsub.f32 %v73, %v218
  %v249 = vsub.f32 %v73, %v222
  %v250 = vsub.f32 %v73, %v226
  %v251 = vsub.f32 %v78, %v214
  %v252 = vsub.f32 %v78, %v218
  %v253 = vsub.f32 %v78, %v222
  %v254 = vsub.f32 %v78, %v226
  %v255 = vsub.f32 %v83, %v214
  %v256 = vsub.f32 %v83, %v218
  %v257 = vsub.f32 %v83, %v222
  %v258 = vsub.f32 %v83, %v226
  %v259 = vsub.f32 %v88, %v214
  %v260 = vsub.f32 %v88, %v218
  %v261 = vsub.f32 %v88, %v222
  %v262 = vsub.f32 %v88, %v226
  %v263 = vsub.f32 %v93, %v214
  %v264 = vsub.f32 %v93, %v218
  %v265 = vsub.f32 %v93, %v222
  %v266 = vsub.f32 %v93, %v226
  %v267 = vsub.f32 %v98, %v214
  %v268 = vsub.f32 %v98, %v218
  %v269 = vsub.f32 %v98, %v222
  %v270 = vsub.f32 %v98, %v226
  %v271 = vsub.f32 %v103, %v214
  %v272 = vsub.f32 %v103, %v218
  %v273 = vsub.f32 %v103, %v222
  %v274 = vsub.f32 %v103, %v226
  %v275 = vsub.f32 %v108, %v214
  %v276 = vsub.f32 %v108, %v218
  %v277 = vsub.f32 %v108, %v222
  %v278 = vsub.f32 %v108, %v226
  %v279 = vsub.f32 %v113, %v214
  %v280 = vsub.f32 %v113, %v218
  %v281 = vsub.f32 %v113, %v222
  %v282 = vsub.f32 %v113, %v226
  %v283 = vsub.f32 %v118, %v214
  %v284 = vsub.f32 %v118, %v218
  %v285 = vsub.f32 %v118, %v222
  %v286 = vsub.f32 %v118, %v226
  %v287 = vsub.f32 %v123, %v214
  %v288 = vsub.f32 %v123, %v218
  %v289 = vsub.f32 %v123, %v222
  %v290 = vsub.f32 %v123, %v226
  %v291 = vsub.f32 %v128, %v214
  %v292 = vsub.f32 %v128, %v218
  %v293 = vsub.f32 %v128, %v222
  %v294 = vsub.f32 %v128, %v226
  %v295 = vsub.f32 %v133, %v214
  %v296 = vsub.f32 %v133, %v218
  %v297 = vsub.f32 %v133, %v222
  %v298 = vsub.f32 %v133, %v226
  %v299 = vsub.f32 %v138, %v214
  %v300 = vsub.f32 %v138, %v218
  %v301 = vsub.f32 %v138, %v222
  %v302 = vsub.f32 %v138, %v226
  %v303 = vsub.f32 %v143, %v214
  %v304 = vsub.f32 %v143, %v218
  %v305 = vsub.f32 %v143, %v222
  %v306 = vsub.f32 %v143, %v226
  %v307 = vsub.f32 %v148, %v214
  %v308 = vsub.f32 %v148, %v218
  %v309 = vsub.f32 %v148, %v222
  %v310 = vsub.f32 %v148, %v226
  %v311 = vsub.f32 %v153, %v214
  %v312 = vsub.f32 %v153, %v218
  %v313 = vsub.f32 %v153, %v222
  %v314 = vsub.f32 %v153, %v226
  %v315 = vsub.f32 %v158, %v214
  %v316 = vsub.f32 %v158, %v218
  %v317 = vsub.f32 %v158, %v222
  %v318 = vsub.f32 %v158, %v226
  %v319 = vsub.f32 %v163, %v214
  %v320 = vsub.f32 %v163, %v218
  %v321 = vsub.f32 %v163, %v222
  %v322 = vsub.f32 %v163, %v226
  %v323 = vsub.f32 %v168, %v214
  %v324 = vsub.f32 %v168, %v218
  %v325 = vsub.f32 %v168, %v222
  %v326 = vsub.f32 %v168, %v226
  %v327 = vsub.f32 %v173, %v214
  %v328 = vsub.f32 %v173, %v218
  %v329 = vsub.f32 %v173, %v222
  %v330 = vsub.f32 %v173, %v226
  %v331 = vsub.f32 %v178, %v214
  %v332 = vsub.f32 %v178, %v218
  %v333 = vsub.f32 %v178, %v222
  %v334 = vsub.f32 %v178, %v226
  %v335 = vsub.f32 %v183, %v214
  %v336 = vsub.f32 %v183, %v218
  %v337 = vsub.f32 %v183, %v222
  %v338 = vsub.f32 %v183, %v226
  %v339 = vsub.f32 %v188, %v214
  %v340 = vsub.f32 %v188, %v218
  %v341 = vsub.f32 %v188, %v222
  %v342 = vsub.f32 %v188, %v226
  %v343 = vsub.f32 %v193, %v214
  %v344 = vsub.f32 %v193, %v218
  %v345 = vsub.f32 %v193, %v222
  %v346 = vsub.f32 %v193, %v226
  %v347 = vsub.f32 %v198, %v214
  %v348 = vsub.f32 %v198, %v218
  %v349 = vsub.f32 %v198, %v222
  %v350 = vsub.f32 %v198, %v226
  %v351 = vsub.f32 %v203, %v214
  %v352 = vsub.f32 %v203, %v218
  %v353 = vsub.f32 %v203, %v222
  %v354 = vsub.f32 %v203, %v226
  %v355 = vsub.f32 %v208, %v214
  %v356 = vsub.f32 %v208, %v218
  %v357 = vsub.f32 %v208, %v222
  %v358 = vsub.f32 %v208, %v226
  %359 = vset.pattern.permute.xlu0 1
  %360 = vperm.xlu0 %359, %v11
  %v361 = vpop.permute.xlu0 %360
  %363 = vset.pattern.permute.xlu0 1
  %364 = vperm.xlu0 %363, %v12
  %v365 = vpop.permute.xlu0 %364
  %367 = vset.pattern.permute.xlu0 1
  %368 = vperm.xlu0 %367, %v13
  %v369 = vpop.permute.xlu0 %368
  %371 = vset.pattern.permute.xlu0 1
  %372 = vperm.xlu0 %371, %v14
  %v373 = vpop.permute.xlu0 %372
  %375 = vset.pattern.permute.xlu0 1
  %376 = vperm.xlu0 %375, %v15
  %v377 = vpop.permute.xlu0 %376
  %379 = vset.pattern.permute.xlu0 1
  %380 = vperm.xlu0 %379, %v16
  %v381 = vpop.permute.xlu0 %380
  %383 = vset.pattern.permute.xlu0 1
  %384 = vperm.xlu0 %383, %v17
  %v385 = vpop.permute.xlu0 %384
  %387 = vset.pattern.permute.xlu0 1
  %388 = vperm.xlu0 %387, %v18
  %v389 = vpop.permute.xlu0 %388
  %391 = vset.pattern.permute.xlu0 1
  %392 = vperm.xlu0 %391, %v19
  %v393 = vpop.permute.xlu0 %392
  %395 = vset.pattern.permute.xlu0 1
  %396 = vperm.xlu0 %395, %v20
  %v397 = vpop.permute.xlu0 %396
  %399 = vset.pattern.permute.xlu0 1
  %400 = vperm.xlu0 %399, %v21
  %v401 = vpop.permute.xlu0 %400
  %403 = vset.pattern.permute.xlu0 1
  %404 = vperm.xlu0 %403, %v22
  %v405 = vpop.permute.xlu0 %404
  %407 = vset.pattern.permute.xlu0 1
  %408 = vperm.xlu0 %407, %v23
  %v409 = vpop.permute.xlu0 %408
  %411 = vset.pattern.permute.xlu0 1
  %412 = vperm.xlu0 %411, %v24
  %v413 = vpop.permute.xlu0 %412
  %415 = vset.pattern.permute.xlu0 1
  %416 = vperm.xlu0 %415, %v25
  %v417 = vpop.permute.xlu0 %416
  %419 = vset.pattern.permute.xlu0 1
  %420 = vperm.xlu0 %419, %v26
  %v421 = vpop.permute.xlu0 %420
  %423 = vset.pattern.permute.xlu0 1
  %424 = vperm.xlu0 %423, %v27
  %v425 = vpop.permute.xlu0 %424
  %427 = vset.pattern.permute.xlu0 1
  %428 = vperm.xlu0 %427, %v28
  %v429 = vpop.permute.xlu0 %428
  %431 = vset.pattern.permute.xlu0 1
  %432 = vperm.xlu0 %431, %v29
  %v433 = vpop.permute.xlu0 %432
  %435 = vset.pattern.permute.xlu0 1
  %436 = vperm.xlu0 %435, %v30
  %v437 = vpop.permute.xlu0 %436
  %439 = vset.pattern.permute.xlu0 1
  %440 = vperm.xlu0 %439, %v31
  %v441 = vpop.permute.xlu0 %440
  %443 = vset.pattern.permute.xlu0 1
  %444 = vperm.xlu0 %443, %v32
  %v445 = vpop.permute.xlu0 %444
  %447 = vset.pattern.permute.xlu0 1
  %448 = vperm.xlu0 %447, %v33
  %v449 = vpop.permute.xlu0 %448
  %451 = vset.pattern.permute.xlu0 1
  %452 = vperm.xlu0 %451, %v34
  %v453 = vpop.permute.xlu0 %452
  %455 = vset.pattern.permute.xlu0 1
  %456 = vperm.xlu0 %455, %v35
  %v457 = vpop.permute.xlu0 %456
  %459 = vset.pattern.permute.xlu0 1
  %460 = vperm.xlu0 %459, %v36
  %v461 = vpop.permute.xlu0 %460
  %463 = vset.pattern.permute.xlu0 1
  %464 = vperm.xlu0 %463, %v37
  %v465 = vpop.permute.xlu0 %464
  %467 = vset.pattern.permute.xlu0 1
  %468 = vperm.xlu0 %467, %v38
  %v469 = vpop.permute.xlu0 %468
  %471 = vset.pattern.permute.xlu0 1
  %472 = vperm.xlu0 %471, %v39
  %v473 = vpop.permute.xlu0 %472
  %475 = vset.pattern.permute.xlu0 1
  %476 = vperm.xlu0 %475, %v40
  %v477 = vpop.permute.xlu0 %476
  %479 = vset.pattern.permute.xlu0 1
  %480 = vperm.xlu0 %479, %v41
  %v481 = vpop.permute.xlu0 %480
  %483 = vset.pattern.permute.xlu0 1
  %484 = vperm.xlu0 %483, %v42
  %v485 = vpop.permute.xlu0 %484
  %v488 = vlaneseq
  %v489 = vshrl.u32 %v488, 7
  %v490 = vsub.s32 0, %v489
  %v491 = vrot.slane %v45, %v490
  %v492 = vlaneseq
  %v493 = vshrl.u32 %v492, 7
  %v494 = vsub.s32 1, %v493
  %v495 = vrot.slane %v45, %v494
  %v496 = vlaneseq
  %v497 = vshrl.u32 %v496, 7
  %v498 = vsub.s32 2, %v497
  %v499 = vrot.slane %v45, %v498
  %v500 = vlaneseq
  %v501 = vshrl.u32 %v500, 7
  %v502 = vsub.s32 3, %v501
  %v503 = vrot.slane %v45, %v502
  %v508 = vsub.f32 %v361, %v491
  %v509 = vsub.f32 %v361, %v495
  %v510 = vsub.f32 %v361, %v499
  %v511 = vsub.f32 %v361, %v503
  %v512 = vsub.f32 %v365, %v491
  %v513 = vsub.f32 %v365, %v495
  %v514 = vsub.f32 %v365, %v499
  %v515 = vsub.f32 %v365, %v503
  %v516 = vsub.f32 %v369, %v491
  %v517 = vsub.f32 %v369, %v495
  %v518 = vsub.f32 %v369, %v499
  %v519 = vsub.f32 %v369, %v503
  %v520 = vsub.f32 %v373, %v491
  %v521 = vsub.f32 %v373, %v495
  %v522 = vsub.f32 %v373, %v499
  %v523 = vsub.f32 %v373, %v503
  %v524 = vsub.f32 %v377, %v491
  %v525 = vsub.f32 %v377, %v495
  %v526 = vsub.f32 %v377, %v499
  %v527 = vsub.f32 %v377, %v503
  %v528 = vsub.f32 %v381, %v491
  %v529 = vsub.f32 %v381, %v495
  %v530 = vsub.f32 %v381, %v499
  %v531 = vsub.f32 %v381, %v503
  %v532 = vsub.f32 %v385, %v491
  %v533 = vsub.f32 %v385, %v495
  %v534 = vsub.f32 %v385, %v499
  %v535 = vsub.f32 %v385, %v503
  %v536 = vsub.f32 %v389, %v491
  %v537 = vsub.f32 %v389, %v495
  %v538 = vsub.f32 %v389, %v499
  %v539 = vsub.f32 %v389, %v503
  %v540 = vsub.f32 %v393, %v491
  %v541 = vsub.f32 %v393, %v495
  %v542 = vsub.f32 %v393, %v499
  %v543 = vsub.f32 %v393, %v503
  %v544 = vsub.f32 %v397, %v491
  %v545 = vsub.f32 %v397, %v495
  %v546 = vsub.f32 %v397, %v499
  %v547 = vsub.f32 %v397, %v503
  %v548 = vsub.f32 %v401, %v491
  %v549 = vsub.f32 %v401, %v495
  %v550 = vsub.f32 %v401, %v499
  %v551 = vsub.f32 %v401, %v503
  %v552 = vsub.f32 %v405, %v491
  %v553 = vsub.f32 %v405, %v495
  %v554 = vsub.f32 %v405, %v499
  %v555 = vsub.f32 %v405, %v503
  %v556 = vsub.f32 %v409, %v491
  %v557 = vsub.f32 %v409, %v495
  %v558 = vsub.f32 %v409, %v499
  %v559 = vsub.f32 %v409, %v503
  %v560 = vsub.f32 %v413, %v491
  %v561 = vsub.f32 %v413, %v495
  %v562 = vsub.f32 %v413, %v499
  %v563 = vsub.f32 %v413, %v503
  %v564 = vsub.f32 %v417, %v491
  %v565 = vsub.f32 %v417, %v495
  %v566 = vsub.f32 %v417, %v499
  %v567 = vsub.f32 %v417, %v503
  %v568 = vsub.f32 %v421, %v491
  %v569 = vsub.f32 %v421, %v495
  %v570 = vsub.f32 %v421, %v499
  %v571 = vsub.f32 %v421, %v503
  %v572 = vsub.f32 %v425, %v491
  %v573 = vsub.f32 %v425, %v495
  %v574 = vsub.f32 %v425, %v499
  %v575 = vsub.f32 %v425, %v503
  %v576 = vsub.f32 %v429, %v491
  %v577 = vsub.f32 %v429, %v495
  %v578 = vsub.f32 %v429, %v499
  %v579 = vsub.f32 %v429, %v503
  %v580 = vsub.f32 %v433, %v491
  %v581 = vsub.f32 %v433, %v495
  %v582 = vsub.f32 %v433, %v499
  %v583 = vsub.f32 %v433, %v503
  %v584 = vsub.f32 %v437, %v491
  %v585 = vsub.f32 %v437, %v495
  %v586 = vsub.f32 %v437, %v499
  %v587 = vsub.f32 %v437, %v503
  %v588 = vsub.f32 %v441, %v491
  %v589 = vsub.f32 %v441, %v495
  %v590 = vsub.f32 %v441, %v499
  %v591 = vsub.f32 %v441, %v503
  %v592 = vsub.f32 %v445, %v491
  %v593 = vsub.f32 %v445, %v495
  %v594 = vsub.f32 %v445, %v499
  %v595 = vsub.f32 %v445, %v503
  %v596 = vsub.f32 %v449, %v491
  %v597 = vsub.f32 %v449, %v495
  %v598 = vsub.f32 %v449, %v499
  %v599 = vsub.f32 %v449, %v503
  %v600 = vsub.f32 %v453, %v491
  %v601 = vsub.f32 %v453, %v495
  %v602 = vsub.f32 %v453, %v499
  %v603 = vsub.f32 %v453, %v503
  %v604 = vsub.f32 %v457, %v491
  %v605 = vsub.f32 %v457, %v495
  %v606 = vsub.f32 %v457, %v499
  %v607 = vsub.f32 %v457, %v503
  %v608 = vsub.f32 %v461, %v491
  %v609 = vsub.f32 %v461, %v495
  %v610 = vsub.f32 %v461, %v499
  %v611 = vsub.f32 %v461, %v503
  %v612 = vsub.f32 %v465, %v491
  %v613 = vsub.f32 %v465, %v495
  %v614 = vsub.f32 %v465, %v499
  %v615 = vsub.f32 %v465, %v503
  %v616 = vsub.f32 %v469, %v491
  %v617 = vsub.f32 %v469, %v495
  %v618 = vsub.f32 %v469, %v499
  %v619 = vsub.f32 %v469, %v503
  %v620 = vsub.f32 %v473, %v491
  %v621 = vsub.f32 %v473, %v495
  %v622 = vsub.f32 %v473, %v499
  %v623 = vsub.f32 %v473, %v503
  %v624 = vsub.f32 %v477, %v491
  %v625 = vsub.f32 %v477, %v495
  %v626 = vsub.f32 %v477, %v499
  %v627 = vsub.f32 %v477, %v503
  %v628 = vsub.f32 %v481, %v491
  %v629 = vsub.f32 %v481, %v495
  %v630 = vsub.f32 %v481, %v499
  %v631 = vsub.f32 %v481, %v503
  %v632 = vsub.f32 %v485, %v491
  %v633 = vsub.f32 %v485, %v495
  %v634 = vsub.f32 %v485, %v499
  %v635 = vsub.f32 %v485, %v503
  %636 = vset.pattern.permute.xlu0 2
  %637 = vperm.xlu0 %636, %v11
  %v638 = vpop.permute.xlu0 %637
  %640 = vset.pattern.permute.xlu0 2
  %641 = vperm.xlu0 %640, %v12
  %v642 = vpop.permute.xlu0 %641
  %644 = vset.pattern.permute.xlu0 2
  %645 = vperm.xlu0 %644, %v13
  %v646 = vpop.permute.xlu0 %645
  %648 = vset.pattern.permute.xlu0 2
  %649 = vperm.xlu0 %648, %v14
  %v650 = vpop.permute.xlu0 %649
  %652 = vset.pattern.permute.xlu0 2
  %653 = vperm.xlu0 %652, %v15
  %v654 = vpop.permute.xlu0 %653
  %656 = vset.pattern.permute.xlu0 2
  %657 = vperm.xlu0 %656, %v16
  %v658 = vpop.permute.xlu0 %657
  %660 = vset.pattern.permute.xlu0 2
  %661 = vperm.xlu0 %660, %v17
  %v662 = vpop.permute.xlu0 %661
  %664 = vset.pattern.permute.xlu0 2
  %665 = vperm.xlu0 %664, %v18
  %v666 = vpop.permute.xlu0 %665
  %668 = vset.pattern.permute.xlu0 2
  %669 = vperm.xlu0 %668, %v19
  %v670 = vpop.permute.xlu0 %669
  %672 = vset.pattern.permute.xlu0 2
  %673 = vperm.xlu0 %672, %v20
  %v674 = vpop.permute.xlu0 %673
  %676 = vset.pattern.permute.xlu0 2
  %677 = vperm.xlu0 %676, %v21
  %v678 = vpop.permute.xlu0 %677
  %680 = vset.pattern.permute.xlu0 2
  %681 = vperm.xlu0 %680, %v22
  %v682 = vpop.permute.xlu0 %681
  %684 = vset.pattern.permute.xlu0 2
  %685 = vperm.xlu0 %684, %v23
  %v686 = vpop.permute.xlu0 %685
  %688 = vset.pattern.permute.xlu0 2
  %689 = vperm.xlu0 %688, %v24
  %v690 = vpop.permute.xlu0 %689
  %692 = vset.pattern.permute.xlu0 2
  %693 = vperm.xlu0 %692, %v25
  %v694 = vpop.permute.xlu0 %693
  %696 = vset.pattern.permute.xlu0 2
  %697 = vperm.xlu0 %696, %v26
  %v698 = vpop.permute.xlu0 %697
  %700 = vset.pattern.permute.xlu0 2
  %701 = vperm.xlu0 %700, %v27
  %v702 = vpop.permute.xlu0 %701
  %704 = vset.pattern.permute.xlu0 2
  %705 = vperm.xlu0 %704, %v28
  %v706 = vpop.permute.xlu0 %705
  %708 = vset.pattern.permute.xlu0 2
  %709 = vperm.xlu0 %708, %v29
  %v710 = vpop.permute.xlu0 %709
  %712 = vset.pattern.permute.xlu0 2
  %713 = vperm.xlu0 %712, %v30
  %v714 = vpop.permute.xlu0 %713
  %716 = vset.pattern.permute.xlu0 2
  %717 = vperm.xlu0 %716, %v31
  %v718 = vpop.permute.xlu0 %717
  %720 = vset.pattern.permute.xlu0 2
  %721 = vperm.xlu0 %720, %v32
  %v722 = vpop.permute.xlu0 %721
  %724 = vset.pattern.permute.xlu0 2
  %725 = vperm.xlu0 %724, %v33
  %v726 = vpop.permute.xlu0 %725
  %728 = vset.pattern.permute.xlu0 2
  %729 = vperm.xlu0 %728, %v34
  %v730 = vpop.permute.xlu0 %729
  %732 = vset.pattern.permute.xlu0 2
  %733 = vperm.xlu0 %732, %v35
  %v734 = vpop.permute.xlu0 %733
  %736 = vset.pattern.permute.xlu0 2
  %737 = vperm.xlu0 %736, %v36
  %v738 = vpop.permute.xlu0 %737
  %740 = vset.pattern.permute.xlu0 2
  %741 = vperm.xlu0 %740, %v37
  %v742 = vpop.permute.xlu0 %741
  %744 = vset.pattern.permute.xlu0 2
  %745 = vperm.xlu0 %744, %v38
  %v746 = vpop.permute.xlu0 %745
  %748 = vset.pattern.permute.xlu0 2
  %749 = vperm.xlu0 %748, %v39
  %v750 = vpop.permute.xlu0 %749
  %752 = vset.pattern.permute.xlu0 2
  %753 = vperm.xlu0 %752, %v40
  %v754 = vpop.permute.xlu0 %753
  %756 = vset.pattern.permute.xlu0 2
  %757 = vperm.xlu0 %756, %v41
  %v758 = vpop.permute.xlu0 %757
  %760 = vset.pattern.permute.xlu0 2
  %761 = vperm.xlu0 %760, %v42
  %v762 = vpop.permute.xlu0 %761
  %v765 = vlaneseq
  %v766 = vshrl.u32 %v765, 7
  %v767 = vsub.s32 0, %v766
  %v768 = vrot.slane %v47, %v767
  %v769 = vlaneseq
  %v770 = vshrl.u32 %v769, 7
  %v771 = vsub.s32 1, %v770
  %v772 = vrot.slane %v47, %v771
  %v773 = vlaneseq
  %v774 = vshrl.u32 %v773, 7
  %v775 = vsub.s32 2, %v774
  %v776 = vrot.slane %v47, %v775
  %v777 = vlaneseq
  %v778 = vshrl.u32 %v777, 7
  %v779 = vsub.s32 3, %v778
  %v780 = vrot.slane %v47, %v779
  %v785 = vsub.f32 %v638, %v768
  %v786 = vsub.f32 %v638, %v772
  %v787 = vsub.f32 %v638, %v776
  %v788 = vsub.f32 %v638, %v780
  %v789 = vsub.f32 %v642, %v768
  %v790 = vsub.f32 %v642, %v772
  %v791 = vsub.f32 %v642, %v776
  %v792 = vsub.f32 %v642, %v780
  %v793 = vsub.f32 %v646, %v768
  %v794 = vsub.f32 %v646, %v772
  %v795 = vsub.f32 %v646, %v776
  %v796 = vsub.f32 %v646, %v780
  %v797 = vsub.f32 %v650, %v768
  %v798 = vsub.f32 %v650, %v772
  %v799 = vsub.f32 %v650, %v776
  %v800 = vsub.f32 %v650, %v780
  %v801 = vsub.f32 %v654, %v768
  %v802 = vsub.f32 %v654, %v772
  %v803 = vsub.f32 %v654, %v776
  %v804 = vsub.f32 %v654, %v780
  %v805 = vsub.f32 %v658, %v768
  %v806 = vsub.f32 %v658, %v772
  %v807 = vsub.f32 %v658, %v776
  %v808 = vsub.f32 %v658, %v780
  %v809 = vsub.f32 %v662, %v768
  %v810 = vsub.f32 %v662, %v772
  %v811 = vsub.f32 %v662, %v776
  %v812 = vsub.f32 %v662, %v780
  %v813 = vsub.f32 %v666, %v768
  %v814 = vsub.f32 %v666, %v772
  %v815 = vsub.f32 %v666, %v776
  %v816 = vsub.f32 %v666, %v780
  %v817 = vsub.f32 %v670, %v768
  %v818 = vsub.f32 %v670, %v772
  %v819 = vsub.f32 %v670, %v776
  %v820 = vsub.f32 %v670, %v780
  %v821 = vsub.f32 %v674, %v768
  %v822 = vsub.f32 %v674, %v772
  %v823 = vsub.f32 %v674, %v776
  %v824 = vsub.f32 %v674, %v780
  %v825 = vsub.f32 %v678, %v768
  %v826 = vsub.f32 %v678, %v772
  %v827 = vsub.f32 %v678, %v776
  %v828 = vsub.f32 %v678, %v780
  %v829 = vsub.f32 %v682, %v768
  %v830 = vsub.f32 %v682, %v772
  %v831 = vsub.f32 %v682, %v776
  %v832 = vsub.f32 %v682, %v780
  %v833 = vsub.f32 %v686, %v768
  %v834 = vsub.f32 %v686, %v772
  %v835 = vsub.f32 %v686, %v776
  %v836 = vsub.f32 %v686, %v780
  %v837 = vsub.f32 %v690, %v768
  %v838 = vsub.f32 %v690, %v772
  %v839 = vsub.f32 %v690, %v776
  %v840 = vsub.f32 %v690, %v780
  %v841 = vsub.f32 %v694, %v768
  %v842 = vsub.f32 %v694, %v772
  %v843 = vsub.f32 %v694, %v776
  %v844 = vsub.f32 %v694, %v780
  %v845 = vsub.f32 %v698, %v768
  %v846 = vsub.f32 %v698, %v772
  %v847 = vsub.f32 %v698, %v776
  %v848 = vsub.f32 %v698, %v780
  %v849 = vsub.f32 %v702, %v768
  %v850 = vsub.f32 %v702, %v772
  %v851 = vsub.f32 %v702, %v776
  %v852 = vsub.f32 %v702, %v780
  %v853 = vsub.f32 %v706, %v768
  %v854 = vsub.f32 %v706, %v772
  %v855 = vsub.f32 %v706, %v776
  %v856 = vsub.f32 %v706, %v780
  %v857 = vsub.f32 %v710, %v768
  %v858 = vsub.f32 %v710, %v772
  %v859 = vsub.f32 %v710, %v776
  %v860 = vsub.f32 %v710, %v780
  %v861 = vsub.f32 %v714, %v768
  %v862 = vsub.f32 %v714, %v772
  %v863 = vsub.f32 %v714, %v776
  %v864 = vsub.f32 %v714, %v780
  %v865 = vsub.f32 %v718, %v768
  %v866 = vsub.f32 %v718, %v772
  %v867 = vsub.f32 %v718, %v776
  %v868 = vsub.f32 %v718, %v780
  %v869 = vsub.f32 %v722, %v768
  %v870 = vsub.f32 %v722, %v772
  %v871 = vsub.f32 %v722, %v776
  %v872 = vsub.f32 %v722, %v780
  %v873 = vsub.f32 %v726, %v768
  %v874 = vsub.f32 %v726, %v772
  %v875 = vsub.f32 %v726, %v776
  %v876 = vsub.f32 %v726, %v780
  %v877 = vsub.f32 %v730, %v768
  %v878 = vsub.f32 %v730, %v772
  %v879 = vsub.f32 %v730, %v776
  %v880 = vsub.f32 %v730, %v780
  %v881 = vsub.f32 %v734, %v768
  %v882 = vsub.f32 %v734, %v772
  %v883 = vsub.f32 %v734, %v776
  %v884 = vsub.f32 %v734, %v780
  %v885 = vsub.f32 %v738, %v768
  %v886 = vsub.f32 %v738, %v772
  %v887 = vsub.f32 %v738, %v776
  %v888 = vsub.f32 %v738, %v780
  %v889 = vsub.f32 %v742, %v768
  %v890 = vsub.f32 %v742, %v772
  %v891 = vsub.f32 %v742, %v776
  %v892 = vsub.f32 %v742, %v780
  %v893 = vsub.f32 %v746, %v768
  %v894 = vsub.f32 %v746, %v772
  %v895 = vsub.f32 %v746, %v776
  %v896 = vsub.f32 %v746, %v780
  %v897 = vsub.f32 %v750, %v768
  %v898 = vsub.f32 %v750, %v772
  %v899 = vsub.f32 %v750, %v776
  %v900 = vsub.f32 %v750, %v780
  %v901 = vsub.f32 %v754, %v768
  %v902 = vsub.f32 %v754, %v772
  %v903 = vsub.f32 %v754, %v776
  %v904 = vsub.f32 %v754, %v780
  %v905 = vsub.f32 %v758, %v768
  %v906 = vsub.f32 %v758, %v772
  %v907 = vsub.f32 %v758, %v776
  %v908 = vsub.f32 %v758, %v780
  %v909 = vsub.f32 %v762, %v768
  %v910 = vsub.f32 %v762, %v772
  %v911 = vsub.f32 %v762, %v776
  %v912 = vsub.f32 %v762, %v780
  %v913 = vmul.f32 %v231, %v231
  %v914 = vmul.f32 %v232, %v232
  %v915 = vmul.f32 %v233, %v233
  %v916 = vmul.f32 %v234, %v234
  %v917 = vmul.f32 %v235, %v235
  %v918 = vmul.f32 %v236, %v236
  %v919 = vmul.f32 %v237, %v237
  %v920 = vmul.f32 %v238, %v238
  %v921 = vmul.f32 %v239, %v239
  %v922 = vmul.f32 %v240, %v240
  %v923 = vmul.f32 %v241, %v241
  %v924 = vmul.f32 %v242, %v242
  %v925 = vmul.f32 %v243, %v243
  %v926 = vmul.f32 %v244, %v244
  %v927 = vmul.f32 %v245, %v245
  %v928 = vmul.f32 %v246, %v246
  %v929 = vmul.f32 %v247, %v247
  %v930 = vmul.f32 %v248, %v248
  %v931 = vmul.f32 %v249, %v249
  %v932 = vmul.f32 %v250, %v250
  %v933 = vmul.f32 %v251, %v251
  %v934 = vmul.f32 %v252, %v252
  %v935 = vmul.f32 %v253, %v253
  %v936 = vmul.f32 %v254, %v254
  %v937 = vmul.f32 %v255, %v255
  %v938 = vmul.f32 %v256, %v256
  %v939 = vmul.f32 %v257, %v257
  %v940 = vmul.f32 %v258, %v258
  %v941 = vmul.f32 %v259, %v259
  %v942 = vmul.f32 %v260, %v260
  %v943 = vmul.f32 %v261, %v261
  %v944 = vmul.f32 %v262, %v262
  %v945 = vmul.f32 %v263, %v263
  %v946 = vmul.f32 %v264, %v264
  %v947 = vmul.f32 %v265, %v265
  %v948 = vmul.f32 %v266, %v266
  %v949 = vmul.f32 %v267, %v267
  %v950 = vmul.f32 %v268, %v268
  %v951 = vmul.f32 %v269, %v269
  %v952 = vmul.f32 %v270, %v270
  %v953 = vmul.f32 %v271, %v271
  %v954 = vmul.f32 %v272, %v272
  %v955 = vmul.f32 %v273, %v273
  %v956 = vmul.f32 %v274, %v274
  %v957 = vmul.f32 %v275, %v275
  %v958 = vmul.f32 %v276, %v276
  %v959 = vmul.f32 %v277, %v277
  %v960 = vmul.f32 %v278, %v278
  %v961 = vmul.f32 %v279, %v279
  %v962 = vmul.f32 %v280, %v280
  %v963 = vmul.f32 %v281, %v281
  %v964 = vmul.f32 %v282, %v282
  %v965 = vmul.f32 %v283, %v283
  %v966 = vmul.f32 %v284, %v284
  %v967 = vmul.f32 %v285, %v285
  %v968 = vmul.f32 %v286, %v286
  %v969 = vmul.f32 %v287, %v287
  %v970 = vmul.f32 %v288, %v288
  %v971 = vmul.f32 %v289, %v289
  %v972 = vmul.f32 %v290, %v290
  %v973 = vmul.f32 %v291, %v291
  %v974 = vmul.f32 %v292, %v292
  %v975 = vmul.f32 %v293, %v293
  %v976 = vmul.f32 %v294, %v294
  %v977 = vmul.f32 %v295, %v295
  %v978 = vmul.f32 %v296, %v296
  %v979 = vmul.f32 %v297, %v297
  %v980 = vmul.f32 %v298, %v298
  %v981 = vmul.f32 %v299, %v299
  %v982 = vmul.f32 %v300, %v300
  %v983 = vmul.f32 %v301, %v301
  %v984 = vmul.f32 %v302, %v302
  %v985 = vmul.f32 %v303, %v303
  %v986 = vmul.f32 %v304, %v304
  %v987 = vmul.f32 %v305, %v305
  %v988 = vmul.f32 %v306, %v306
  %v989 = vmul.f32 %v307, %v307
  %v990 = vmul.f32 %v308, %v308
  %v991 = vmul.f32 %v309, %v309
  %v992 = vmul.f32 %v310, %v310
  %v993 = vmul.f32 %v311, %v311
  %v994 = vmul.f32 %v312, %v312
  %v995 = vmul.f32 %v313, %v313
  %v996 = vmul.f32 %v314, %v314
  %v997 = vmul.f32 %v315, %v315
  %v998 = vmul.f32 %v316, %v316
  %v999 = vmul.f32 %v317, %v317
  %v1000 = vmul.f32 %v318, %v318
  %v1001 = vmul.f32 %v319, %v319
  %v1002 = vmul.f32 %v320, %v320
  %v1003 = vmul.f32 %v321, %v321
  %v1004 = vmul.f32 %v322, %v322
  %v1005 = vmul.f32 %v323, %v323
  %v1006 = vmul.f32 %v324, %v324
  %v1007 = vmul.f32 %v325, %v325
  %v1008 = vmul.f32 %v326, %v326
  %v1009 = vmul.f32 %v327, %v327
  %v1010 = vmul.f32 %v328, %v328
  %v1011 = vmul.f32 %v329, %v329
  %v1012 = vmul.f32 %v330, %v330
  %v1013 = vmul.f32 %v331, %v331
  %v1014 = vmul.f32 %v332, %v332
  %v1015 = vmul.f32 %v333, %v333
  %v1016 = vmul.f32 %v334, %v334
  %v1017 = vmul.f32 %v335, %v335
  %v1018 = vmul.f32 %v336, %v336
  %v1019 = vmul.f32 %v337, %v337
  %v1020 = vmul.f32 %v338, %v338
  %v1021 = vmul.f32 %v339, %v339
  %v1022 = vmul.f32 %v340, %v340
  %v1023 = vmul.f32 %v341, %v341
  %v1024 = vmul.f32 %v342, %v342
  %v1025 = vmul.f32 %v343, %v343
  %v1026 = vmul.f32 %v344, %v344
  %v1027 = vmul.f32 %v345, %v345
  %v1028 = vmul.f32 %v346, %v346
  %v1029 = vmul.f32 %v347, %v347
  %v1030 = vmul.f32 %v348, %v348
  %v1031 = vmul.f32 %v349, %v349
  %v1032 = vmul.f32 %v350, %v350
  %v1033 = vmul.f32 %v351, %v351
  %v1034 = vmul.f32 %v352, %v352
  %v1035 = vmul.f32 %v353, %v353
  %v1036 = vmul.f32 %v354, %v354
  %v1037 = vmul.f32 %v355, %v355
  %v1038 = vmul.f32 %v356, %v356
  %v1039 = vmul.f32 %v357, %v357
  %v1040 = vmul.f32 %v358, %v358
  %v1041 = vmul.f32 %v508, %v508
  %v1042 = vmul.f32 %v509, %v509
  %v1043 = vmul.f32 %v510, %v510
  %v1044 = vmul.f32 %v511, %v511
  %v1045 = vmul.f32 %v512, %v512
  %v1046 = vmul.f32 %v513, %v513
  %v1047 = vmul.f32 %v514, %v514
  %v1048 = vmul.f32 %v515, %v515
  %v1049 = vmul.f32 %v516, %v516
  %v1050 = vmul.f32 %v517, %v517
  %v1051 = vmul.f32 %v518, %v518
  %v1052 = vmul.f32 %v519, %v519
  %v1053 = vmul.f32 %v520, %v520
  %v1054 = vmul.f32 %v521, %v521
  %v1055 = vmul.f32 %v522, %v522
  %v1056 = vmul.f32 %v523, %v523
  %v1057 = vmul.f32 %v524, %v524
  %v1058 = vmul.f32 %v525, %v525
  %v1059 = vmul.f32 %v526, %v526
  %v1060 = vmul.f32 %v527, %v527
  %v1061 = vmul.f32 %v528, %v528
  %v1062 = vmul.f32 %v529, %v529
  %v1063 = vmul.f32 %v530, %v530
  %v1064 = vmul.f32 %v531, %v531
  %v1065 = vmul.f32 %v532, %v532
  %v1066 = vmul.f32 %v533, %v533
  %v1067 = vmul.f32 %v534, %v534
  %v1068 = vmul.f32 %v535, %v535
  %v1069 = vmul.f32 %v536, %v536
  %v1070 = vmul.f32 %v537, %v537
  %v1071 = vmul.f32 %v538, %v538
  %v1072 = vmul.f32 %v539, %v539
  %v1073 = vmul.f32 %v540, %v540
  %v1074 = vmul.f32 %v541, %v541
  %v1075 = vmul.f32 %v542, %v542
  %v1076 = vmul.f32 %v543, %v543
  %v1077 = vmul.f32 %v544, %v544
  %v1078 = vmul.f32 %v545, %v545
  %v1079 = vmul.f32 %v546, %v546
  %v1080 = vmul.f32 %v547, %v547
  %v1081 = vmul.f32 %v548, %v548
  %v1082 = vmul.f32 %v549, %v549
  %v1083 = vmul.f32 %v550, %v550
  %v1084 = vmul.f32 %v551, %v551
  %v1085 = vmul.f32 %v552, %v552
  %v1086 = vmul.f32 %v553, %v553
  %v1087 = vmul.f32 %v554, %v554
  %v1088 = vmul.f32 %v555, %v555
  %v1089 = vmul.f32 %v556, %v556
  %v1090 = vmul.f32 %v557, %v557
  %v1091 = vmul.f32 %v558, %v558
  %v1092 = vmul.f32 %v559, %v559
  %v1093 = vmul.f32 %v560, %v560
  %v1094 = vmul.f32 %v561, %v561
  %v1095 = vmul.f32 %v562, %v562
  %v1096 = vmul.f32 %v563, %v563
  %v1097 = vmul.f32 %v564, %v564
  %v1098 = vmul.f32 %v565, %v565
  %v1099 = vmul.f32 %v566, %v566
  %v1100 = vmul.f32 %v567, %v567
  %v1101 = vmul.f32 %v568, %v568
  %v1102 = vmul.f32 %v569, %v569
  %v1103 = vmul.f32 %v570, %v570
  %v1104 = vmul.f32 %v571, %v571
  %v1105 = vmul.f32 %v572, %v572
  %v1106 = vmul.f32 %v573, %v573
  %v1107 = vmul.f32 %v574, %v574
  %v1108 = vmul.f32 %v575, %v575
  %v1109 = vmul.f32 %v576, %v576
  %v1110 = vmul.f32 %v577, %v577
  %v1111 = vmul.f32 %v578, %v578
  %v1112 = vmul.f32 %v579, %v579
  %v1113 = vmul.f32 %v580, %v580
  %v1114 = vmul.f32 %v581, %v581
  %v1115 = vmul.f32 %v582, %v582
  %v1116 = vmul.f32 %v583, %v583
  %v1117 = vmul.f32 %v584, %v584
  %v1118 = vmul.f32 %v585, %v585
  %v1119 = vmul.f32 %v586, %v586
  %v1120 = vmul.f32 %v587, %v587
  %v1121 = vmul.f32 %v588, %v588
  %v1122 = vmul.f32 %v589, %v589
  %v1123 = vmul.f32 %v590, %v590
  %v1124 = vmul.f32 %v591, %v591
  %v1125 = vmul.f32 %v592, %v592
  %v1126 = vmul.f32 %v593, %v593
  %v1127 = vmul.f32 %v594, %v594
  %v1128 = vmul.f32 %v595, %v595
  %v1129 = vmul.f32 %v596, %v596
  %v1130 = vmul.f32 %v597, %v597
  %v1131 = vmul.f32 %v598, %v598
  %v1132 = vmul.f32 %v599, %v599
  %v1133 = vmul.f32 %v600, %v600
  %v1134 = vmul.f32 %v601, %v601
  %v1135 = vmul.f32 %v602, %v602
  %v1136 = vmul.f32 %v603, %v603
  %v1137 = vmul.f32 %v604, %v604
  %v1138 = vmul.f32 %v605, %v605
  %v1139 = vmul.f32 %v606, %v606
  %v1140 = vmul.f32 %v607, %v607
  %v1141 = vmul.f32 %v608, %v608
  %v1142 = vmul.f32 %v609, %v609
  %v1143 = vmul.f32 %v610, %v610
  %v1144 = vmul.f32 %v611, %v611
  %v1145 = vmul.f32 %v612, %v612
  %v1146 = vmul.f32 %v613, %v613
  %v1147 = vmul.f32 %v614, %v614
  %v1148 = vmul.f32 %v615, %v615
  %v1149 = vmul.f32 %v616, %v616
  %v1150 = vmul.f32 %v617, %v617
  %v1151 = vmul.f32 %v618, %v618
  %v1152 = vmul.f32 %v619, %v619
  %v1153 = vmul.f32 %v620, %v620
  %v1154 = vmul.f32 %v621, %v621
  %v1155 = vmul.f32 %v622, %v622
  %v1156 = vmul.f32 %v623, %v623
  %v1157 = vmul.f32 %v624, %v624
  %v1158 = vmul.f32 %v625, %v625
  %v1159 = vmul.f32 %v626, %v626
  %v1160 = vmul.f32 %v627, %v627
  %v1161 = vmul.f32 %v628, %v628
  %v1162 = vmul.f32 %v629, %v629
  %v1163 = vmul.f32 %v630, %v630
  %v1164 = vmul.f32 %v631, %v631
  %v1165 = vmul.f32 %v632, %v632
  %v1166 = vmul.f32 %v633, %v633
  %v1167 = vmul.f32 %v634, %v634
  %v1168 = vmul.f32 %v635, %v635
  %v1169 = vadd.f32 %v913, %v1041
  %v1170 = vadd.f32 %v914, %v1042
  %v1171 = vadd.f32 %v915, %v1043
  %v1172 = vadd.f32 %v916, %v1044
  %v1173 = vadd.f32 %v917, %v1045
  %v1174 = vadd.f32 %v918, %v1046
  %v1175 = vadd.f32 %v919, %v1047
  %v1176 = vadd.f32 %v920, %v1048
  %v1177 = vadd.f32 %v921, %v1049
  %v1178 = vadd.f32 %v922, %v1050
  %v1179 = vadd.f32 %v923, %v1051
  %v1180 = vadd.f32 %v924, %v1052
  %v1181 = vadd.f32 %v925, %v1053
  %v1182 = vadd.f32 %v926, %v1054
  %v1183 = vadd.f32 %v927, %v1055
  %v1184 = vadd.f32 %v928, %v1056
  %v1185 = vadd.f32 %v929, %v1057
  %v1186 = vadd.f32 %v930, %v1058
  %v1187 = vadd.f32 %v931, %v1059
  %v1188 = vadd.f32 %v932, %v1060
  %v1189 = vadd.f32 %v933, %v1061
  %v1190 = vadd.f32 %v934, %v1062
  %v1191 = vadd.f32 %v935, %v1063
  %v1192 = vadd.f32 %v936, %v1064
  %v1193 = vadd.f32 %v937, %v1065
  %v1194 = vadd.f32 %v938, %v1066
  %v1195 = vadd.f32 %v939, %v1067
  %v1196 = vadd.f32 %v940, %v1068
  %v1197 = vadd.f32 %v941, %v1069
  %v1198 = vadd.f32 %v942, %v1070
  %v1199 = vadd.f32 %v943, %v1071
  %v1200 = vadd.f32 %v944, %v1072
  %v1201 = vadd.f32 %v945, %v1073
  %v1202 = vadd.f32 %v946, %v1074
  %v1203 = vadd.f32 %v947, %v1075
  %v1204 = vadd.f32 %v948, %v1076
  %v1205 = vadd.f32 %v949, %v1077
  %v1206 = vadd.f32 %v950, %v1078
  %v1207 = vadd.f32 %v951, %v1079
  %v1208 = vadd.f32 %v952, %v1080
  %v1209 = vadd.f32 %v953, %v1081
  %v1210 = vadd.f32 %v954, %v1082
  %v1211 = vadd.f32 %v955, %v1083
  %v1212 = vadd.f32 %v956, %v1084
  %v1213 = vadd.f32 %v957, %v1085
  %v1214 = vadd.f32 %v958, %v1086
  %v1215 = vadd.f32 %v959, %v1087
  %v1216 = vadd.f32 %v960, %v1088
  %v1217 = vadd.f32 %v961, %v1089
  %v1218 = vadd.f32 %v962, %v1090
  %v1219 = vadd.f32 %v963, %v1091
  %v1220 = vadd.f32 %v964, %v1092
  %v1221 = vadd.f32 %v965, %v1093
  %v1222 = vadd.f32 %v966, %v1094
  %v1223 = vadd.f32 %v967, %v1095
  %v1224 = vadd.f32 %v968, %v1096
  %v1225 = vadd.f32 %v969, %v1097
  %v1226 = vadd.f32 %v970, %v1098
  %v1227 = vadd.f32 %v971, %v1099
  %v1228 = vadd.f32 %v972, %v1100
  %v1229 = vadd.f32 %v973, %v1101
  %v1230 = vadd.f32 %v974, %v1102
  %v1231 = vadd.f32 %v975, %v1103
  %v1232 = vadd.f32 %v976, %v1104
  %v1233 = vadd.f32 %v977, %v1105
  %v1234 = vadd.f32 %v978, %v1106
  %v1235 = vadd.f32 %v979, %v1107
  %v1236 = vadd.f32 %v980, %v1108
  %v1237 = vadd.f32 %v981, %v1109
  %v1238 = vadd.f32 %v982, %v1110
  %v1239 = vadd.f32 %v983, %v1111
  %v1240 = vadd.f32 %v984, %v1112
  %v1241 = vadd.f32 %v985, %v1113
  %v1242 = vadd.f32 %v986, %v1114
  %v1243 = vadd.f32 %v987, %v1115
  %v1244 = vadd.f32 %v988, %v1116
  %v1245 = vadd.f32 %v989, %v1117
  %v1246 = vadd.f32 %v990, %v1118
  %v1247 = vadd.f32 %v991, %v1119
  %v1248 = vadd.f32 %v992, %v1120
  %v1249 = vadd.f32 %v993, %v1121
  %v1250 = vadd.f32 %v994, %v1122
  %v1251 = vadd.f32 %v995, %v1123
  %v1252 = vadd.f32 %v996, %v1124
  %v1253 = vadd.f32 %v997, %v1125
  %v1254 = vadd.f32 %v998, %v1126
  %v1255 = vadd.f32 %v999, %v1127
  %v1256 = vadd.f32 %v1000, %v1128
  %v1257 = vadd.f32 %v1001, %v1129
  %v1258 = vadd.f32 %v1002, %v1130
  %v1259 = vadd.f32 %v1003, %v1131
  %v1260 = vadd.f32 %v1004, %v1132
  %v1261 = vadd.f32 %v1005, %v1133
  %v1262 = vadd.f32 %v1006, %v1134
  %v1263 = vadd.f32 %v1007, %v1135
  %v1264 = vadd.f32 %v1008, %v1136
  %v1265 = vadd.f32 %v1009, %v1137
  %v1266 = vadd.f32 %v1010, %v1138
  %v1267 = vadd.f32 %v1011, %v1139
  %v1268 = vadd.f32 %v1012, %v1140
  %v1269 = vadd.f32 %v1013, %v1141
  %v1270 = vadd.f32 %v1014, %v1142
  %v1271 = vadd.f32 %v1015, %v1143
  %v1272 = vadd.f32 %v1016, %v1144
  %v1273 = vadd.f32 %v1017, %v1145
  %v1274 = vadd.f32 %v1018, %v1146
  %v1275 = vadd.f32 %v1019, %v1147
  %v1276 = vadd.f32 %v1020, %v1148
  %v1277 = vadd.f32 %v1021, %v1149
  %v1278 = vadd.f32 %v1022, %v1150
  %v1279 = vadd.f32 %v1023, %v1151
  %v1280 = vadd.f32 %v1024, %v1152
  %v1281 = vadd.f32 %v1025, %v1153
  %v1282 = vadd.f32 %v1026, %v1154
  %v1283 = vadd.f32 %v1027, %v1155
  %v1284 = vadd.f32 %v1028, %v1156
  %v1285 = vadd.f32 %v1029, %v1157
  %v1286 = vadd.f32 %v1030, %v1158
  %v1287 = vadd.f32 %v1031, %v1159
  %v1288 = vadd.f32 %v1032, %v1160
  %v1289 = vadd.f32 %v1033, %v1161
  %v1290 = vadd.f32 %v1034, %v1162
  %v1291 = vadd.f32 %v1035, %v1163
  %v1292 = vadd.f32 %v1036, %v1164
  %v1293 = vadd.f32 %v1037, %v1165
  %v1294 = vadd.f32 %v1038, %v1166
  %v1295 = vadd.f32 %v1039, %v1167
  %v1296 = vadd.f32 %v1040, %v1168
  %v1297 = vmul.f32 %v785, %v785
  %v1298 = vmul.f32 %v786, %v786
  %v1299 = vmul.f32 %v787, %v787
  %v1300 = vmul.f32 %v788, %v788
  %v1301 = vmul.f32 %v789, %v789
  %v1302 = vmul.f32 %v790, %v790
  %v1303 = vmul.f32 %v791, %v791
  %v1304 = vmul.f32 %v792, %v792
  %v1305 = vmul.f32 %v793, %v793
  %v1306 = vmul.f32 %v794, %v794
  %v1307 = vmul.f32 %v795, %v795
  %v1308 = vmul.f32 %v796, %v796
  %v1309 = vmul.f32 %v797, %v797
  %v1310 = vmul.f32 %v798, %v798
  %v1311 = vmul.f32 %v799, %v799
  %v1312 = vmul.f32 %v800, %v800
  %v1313 = vmul.f32 %v801, %v801
  %v1314 = vmul.f32 %v802, %v802
  %v1315 = vmul.f32 %v803, %v803
  %v1316 = vmul.f32 %v804, %v804
  %v1317 = vmul.f32 %v805, %v805
  %v1318 = vmul.f32 %v806, %v806
  %v1319 = vmul.f32 %v807, %v807
  %v1320 = vmul.f32 %v808, %v808
  %v1321 = vmul.f32 %v809, %v809
  %v1322 = vmul.f32 %v810, %v810
  %v1323 = vmul.f32 %v811, %v811
  %v1324 = vmul.f32 %v812, %v812
  %v1325 = vmul.f32 %v813, %v813
  %v1326 = vmul.f32 %v814, %v814
  %v1327 = vmul.f32 %v815, %v815
  %v1328 = vmul.f32 %v816, %v816
  %v1329 = vmul.f32 %v817, %v817
  %v1330 = vmul.f32 %v818, %v818
  %v1331 = vmul.f32 %v819, %v819
  %v1332 = vmul.f32 %v820, %v820
  %v1333 = vmul.f32 %v821, %v821
  %v1334 = vmul.f32 %v822, %v822
  %v1335 = vmul.f32 %v823, %v823
  %v1336 = vmul.f32 %v824, %v824
  %v1337 = vmul.f32 %v825, %v825
  %v1338 = vmul.f32 %v826, %v826
  %v1339 = vmul.f32 %v827, %v827
  %v1340 = vmul.f32 %v828, %v828
  %v1341 = vmul.f32 %v829, %v829
  %v1342 = vmul.f32 %v830, %v830
  %v1343 = vmul.f32 %v831, %v831
  %v1344 = vmul.f32 %v832, %v832
  %v1345 = vmul.f32 %v833, %v833
  %v1346 = vmul.f32 %v834, %v834
  %v1347 = vmul.f32 %v835, %v835
  %v1348 = vmul.f32 %v836, %v836
  %v1349 = vmul.f32 %v837, %v837
  %v1350 = vmul.f32 %v838, %v838
  %v1351 = vmul.f32 %v839, %v839
  %v1352 = vmul.f32 %v840, %v840
  %v1353 = vmul.f32 %v841, %v841
  %v1354 = vmul.f32 %v842, %v842
  %v1355 = vmul.f32 %v843, %v843
  %v1356 = vmul.f32 %v844, %v844
  %v1357 = vmul.f32 %v845, %v845
  %v1358 = vmul.f32 %v846, %v846
  %v1359 = vmul.f32 %v847, %v847
  %v1360 = vmul.f32 %v848, %v848
  %v1361 = vmul.f32 %v849, %v849
  %v1362 = vmul.f32 %v850, %v850
  %v1363 = vmul.f32 %v851, %v851
  %v1364 = vmul.f32 %v852, %v852
  %v1365 = vmul.f32 %v853, %v853
  %v1366 = vmul.f32 %v854, %v854
  %v1367 = vmul.f32 %v855, %v855
  %v1368 = vmul.f32 %v856, %v856
  %v1369 = vmul.f32 %v857, %v857
  %v1370 = vmul.f32 %v858, %v858
  %v1371 = vmul.f32 %v859, %v859
  %v1372 = vmul.f32 %v860, %v860
  %v1373 = vmul.f32 %v861, %v861
  %v1374 = vmul.f32 %v862, %v862
  %v1375 = vmul.f32 %v863, %v863
  %v1376 = vmul.f32 %v864, %v864
  %v1377 = vmul.f32 %v865, %v865
  %v1378 = vmul.f32 %v866, %v866
  %v1379 = vmul.f32 %v867, %v867
  %v1380 = vmul.f32 %v868, %v868
  %v1381 = vmul.f32 %v869, %v869
  %v1382 = vmul.f32 %v870, %v870
  %v1383 = vmul.f32 %v871, %v871
  %v1384 = vmul.f32 %v872, %v872
  %v1385 = vmul.f32 %v873, %v873
  %v1386 = vmul.f32 %v874, %v874
  %v1387 = vmul.f32 %v875, %v875
  %v1388 = vmul.f32 %v876, %v876
  %v1389 = vmul.f32 %v877, %v877
  %v1390 = vmul.f32 %v878, %v878
  %v1391 = vmul.f32 %v879, %v879
  %v1392 = vmul.f32 %v880, %v880
  %v1393 = vmul.f32 %v881, %v881
  %v1394 = vmul.f32 %v882, %v882
  %v1395 = vmul.f32 %v883, %v883
  %v1396 = vmul.f32 %v884, %v884
  %v1397 = vmul.f32 %v885, %v885
  %v1398 = vmul.f32 %v886, %v886
  %v1399 = vmul.f32 %v887, %v887
  %v1400 = vmul.f32 %v888, %v888
  %v1401 = vmul.f32 %v889, %v889
  %v1402 = vmul.f32 %v890, %v890
  %v1403 = vmul.f32 %v891, %v891
  %v1404 = vmul.f32 %v892, %v892
  %v1405 = vmul.f32 %v893, %v893
  %v1406 = vmul.f32 %v894, %v894
  %v1407 = vmul.f32 %v895, %v895
  %v1408 = vmul.f32 %v896, %v896
  %v1409 = vmul.f32 %v897, %v897
  %v1410 = vmul.f32 %v898, %v898
  %v1411 = vmul.f32 %v899, %v899
  %v1412 = vmul.f32 %v900, %v900
  %v1413 = vmul.f32 %v901, %v901
  %v1414 = vmul.f32 %v902, %v902
  %v1415 = vmul.f32 %v903, %v903
  %v1416 = vmul.f32 %v904, %v904
  %v1417 = vmul.f32 %v905, %v905
  %v1418 = vmul.f32 %v906, %v906
  %v1419 = vmul.f32 %v907, %v907
  %v1420 = vmul.f32 %v908, %v908
  %v1421 = vmul.f32 %v909, %v909
  %v1422 = vmul.f32 %v910, %v910
  %v1423 = vmul.f32 %v911, %v911
  %v1424 = vmul.f32 %v912, %v912
  %v1425 = vadd.f32 %v1169, %v1297
  %v1426 = vadd.f32 %v1170, %v1298
  %v1427 = vadd.f32 %v1171, %v1299
  %v1428 = vadd.f32 %v1172, %v1300
  %v1429 = vadd.f32 %v1173, %v1301
  %v1430 = vadd.f32 %v1174, %v1302
  %v1431 = vadd.f32 %v1175, %v1303
  %v1432 = vadd.f32 %v1176, %v1304
  %v1433 = vadd.f32 %v1177, %v1305
  %v1434 = vadd.f32 %v1178, %v1306
  %v1435 = vadd.f32 %v1179, %v1307
  %v1436 = vadd.f32 %v1180, %v1308
  %v1437 = vadd.f32 %v1181, %v1309
  %v1438 = vadd.f32 %v1182, %v1310
  %v1439 = vadd.f32 %v1183, %v1311
  %v1440 = vadd.f32 %v1184, %v1312
  %v1441 = vadd.f32 %v1185, %v1313
  %v1442 = vadd.f32 %v1186, %v1314
  %v1443 = vadd.f32 %v1187, %v1315
  %v1444 = vadd.f32 %v1188, %v1316
  %v1445 = vadd.f32 %v1189, %v1317
  %v1446 = vadd.f32 %v1190, %v1318
  %v1447 = vadd.f32 %v1191, %v1319
  %v1448 = vadd.f32 %v1192, %v1320
  %v1449 = vadd.f32 %v1193, %v1321
  %v1450 = vadd.f32 %v1194, %v1322
  %v1451 = vadd.f32 %v1195, %v1323
  %v1452 = vadd.f32 %v1196, %v1324
  %v1453 = vadd.f32 %v1197, %v1325
  %v1454 = vadd.f32 %v1198, %v1326
  %v1455 = vadd.f32 %v1199, %v1327
  %v1456 = vadd.f32 %v1200, %v1328
  %v1457 = vadd.f32 %v1201, %v1329
  %v1458 = vadd.f32 %v1202, %v1330
  %v1459 = vadd.f32 %v1203, %v1331
  %v1460 = vadd.f32 %v1204, %v1332
  %v1461 = vadd.f32 %v1205, %v1333
  %v1462 = vadd.f32 %v1206, %v1334
  %v1463 = vadd.f32 %v1207, %v1335
  %v1464 = vadd.f32 %v1208, %v1336
  %v1465 = vadd.f32 %v1209, %v1337
  %v1466 = vadd.f32 %v1210, %v1338
  %v1467 = vadd.f32 %v1211, %v1339
  %v1468 = vadd.f32 %v1212, %v1340
  %v1469 = vadd.f32 %v1213, %v1341
  %v1470 = vadd.f32 %v1214, %v1342
  %v1471 = vadd.f32 %v1215, %v1343
  %v1472 = vadd.f32 %v1216, %v1344
  %v1473 = vadd.f32 %v1217, %v1345
  %v1474 = vadd.f32 %v1218, %v1346
  %v1475 = vadd.f32 %v1219, %v1347
  %v1476 = vadd.f32 %v1220, %v1348
  %v1477 = vadd.f32 %v1221, %v1349
  %v1478 = vadd.f32 %v1222, %v1350
  %v1479 = vadd.f32 %v1223, %v1351
  %v1480 = vadd.f32 %v1224, %v1352
  %v1481 = vadd.f32 %v1225, %v1353
  %v1482 = vadd.f32 %v1226, %v1354
  %v1483 = vadd.f32 %v1227, %v1355
  %v1484 = vadd.f32 %v1228, %v1356
  %v1485 = vadd.f32 %v1229, %v1357
  %v1486 = vadd.f32 %v1230, %v1358
  %v1487 = vadd.f32 %v1231, %v1359
  %v1488 = vadd.f32 %v1232, %v1360
  %v1489 = vadd.f32 %v1233, %v1361
  %v1490 = vadd.f32 %v1234, %v1362
  %v1491 = vadd.f32 %v1235, %v1363
  %v1492 = vadd.f32 %v1236, %v1364
  %v1493 = vadd.f32 %v1237, %v1365
  %v1494 = vadd.f32 %v1238, %v1366
  %v1495 = vadd.f32 %v1239, %v1367
  %v1496 = vadd.f32 %v1240, %v1368
  %v1497 = vadd.f32 %v1241, %v1369
  %v1498 = vadd.f32 %v1242, %v1370
  %v1499 = vadd.f32 %v1243, %v1371
  %v1500 = vadd.f32 %v1244, %v1372
  %v1501 = vadd.f32 %v1245, %v1373
  %v1502 = vadd.f32 %v1246, %v1374
  %v1503 = vadd.f32 %v1247, %v1375
  %v1504 = vadd.f32 %v1248, %v1376
  %v1505 = vadd.f32 %v1249, %v1377
  %v1506 = vadd.f32 %v1250, %v1378
  %v1507 = vadd.f32 %v1251, %v1379
  %v1508 = vadd.f32 %v1252, %v1380
  %v1509 = vadd.f32 %v1253, %v1381
  %v1510 = vadd.f32 %v1254, %v1382
  %v1511 = vadd.f32 %v1255, %v1383
  %v1512 = vadd.f32 %v1256, %v1384
  %v1513 = vadd.f32 %v1257, %v1385
  %v1514 = vadd.f32 %v1258, %v1386
  %v1515 = vadd.f32 %v1259, %v1387
  %v1516 = vadd.f32 %v1260, %v1388
  %v1517 = vadd.f32 %v1261, %v1389
  %v1518 = vadd.f32 %v1262, %v1390
  %v1519 = vadd.f32 %v1263, %v1391
  %v1520 = vadd.f32 %v1264, %v1392
  %v1521 = vadd.f32 %v1265, %v1393
  %v1522 = vadd.f32 %v1266, %v1394
  %v1523 = vadd.f32 %v1267, %v1395
  %v1524 = vadd.f32 %v1268, %v1396
  %v1525 = vadd.f32 %v1269, %v1397
  %v1526 = vadd.f32 %v1270, %v1398
  %v1527 = vadd.f32 %v1271, %v1399
  %v1528 = vadd.f32 %v1272, %v1400
  %v1529 = vadd.f32 %v1273, %v1401
  %v1530 = vadd.f32 %v1274, %v1402
  %v1531 = vadd.f32 %v1275, %v1403
  %v1532 = vadd.f32 %v1276, %v1404
  %v1533 = vadd.f32 %v1277, %v1405
  %v1534 = vadd.f32 %v1278, %v1406
  %v1535 = vadd.f32 %v1279, %v1407
  %v1536 = vadd.f32 %v1280, %v1408
  %v1537 = vadd.f32 %v1281, %v1409
  %v1538 = vadd.f32 %v1282, %v1410
  %v1539 = vadd.f32 %v1283, %v1411
  %v1540 = vadd.f32 %v1284, %v1412
  %v1541 = vadd.f32 %v1285, %v1413
  %v1542 = vadd.f32 %v1286, %v1414
  %v1543 = vadd.f32 %v1287, %v1415
  %v1544 = vadd.f32 %v1288, %v1416
  %v1545 = vadd.f32 %v1289, %v1417
  %v1546 = vadd.f32 %v1290, %v1418
  %v1547 = vadd.f32 %v1291, %v1419
  %v1548 = vadd.f32 %v1292, %v1420
  %v1549 = vadd.f32 %v1293, %v1421
  %v1550 = vadd.f32 %v1294, %v1422
  %v1551 = vadd.f32 %v1295, %v1423
  %v1552 = vadd.f32 %v1296, %v1424
  %1553 = vset.pattern.permute.xlu0 3
  %1554 = vperm.xlu0 %1553, %v11
  %v1555 = vpop.permute.xlu0 %1554
  %1557 = vset.pattern.permute.xlu0 3
  %1558 = vperm.xlu0 %1557, %v12
  %v1559 = vpop.permute.xlu0 %1558
  %1561 = vset.pattern.permute.xlu0 3
  %1562 = vperm.xlu0 %1561, %v13
  %v1563 = vpop.permute.xlu0 %1562
  %1565 = vset.pattern.permute.xlu0 3
  %1566 = vperm.xlu0 %1565, %v14
  %v1567 = vpop.permute.xlu0 %1566
  %1569 = vset.pattern.permute.xlu0 3
  %1570 = vperm.xlu0 %1569, %v15
  %v1571 = vpop.permute.xlu0 %1570
  %1573 = vset.pattern.permute.xlu0 3
  %1574 = vperm.xlu0 %1573, %v16
  %v1575 = vpop.permute.xlu0 %1574
  %1577 = vset.pattern.permute.xlu0 3
  %1578 = vperm.xlu0 %1577, %v17
  %v1579 = vpop.permute.xlu0 %1578
  %1581 = vset.pattern.permute.xlu0 3
  %1582 = vperm.xlu0 %1581, %v18
  %v1583 = vpop.permute.xlu0 %1582
  %1585 = vset.pattern.permute.xlu0 3
  %1586 = vperm.xlu0 %1585, %v19
  %v1587 = vpop.permute.xlu0 %1586
  %1589 = vset.pattern.permute.xlu0 3
  %1590 = vperm.xlu0 %1589, %v20
  %v1591 = vpop.permute.xlu0 %1590
  %1593 = vset.pattern.permute.xlu0 3
  %1594 = vperm.xlu0 %1593, %v21
  %v1595 = vpop.permute.xlu0 %1594
  %1597 = vset.pattern.permute.xlu0 3
  %1598 = vperm.xlu0 %1597, %v22
  %v1599 = vpop.permute.xlu0 %1598
  %1601 = vset.pattern.permute.xlu0 3
  %1602 = vperm.xlu0 %1601, %v23
  %v1603 = vpop.permute.xlu0 %1602
  %1605 = vset.pattern.permute.xlu0 3
  %1606 = vperm.xlu0 %1605, %v24
  %v1607 = vpop.permute.xlu0 %1606
  %1609 = vset.pattern.permute.xlu0 3
  %1610 = vperm.xlu0 %1609, %v25
  %v1611 = vpop.permute.xlu0 %1610
  %1613 = vset.pattern.permute.xlu0 3
  %1614 = vperm.xlu0 %1613, %v26
  %v1615 = vpop.permute.xlu0 %1614
  %1617 = vset.pattern.permute.xlu0 3
  %1618 = vperm.xlu0 %1617, %v27
  %v1619 = vpop.permute.xlu0 %1618
  %1621 = vset.pattern.permute.xlu0 3
  %1622 = vperm.xlu0 %1621, %v28
  %v1623 = vpop.permute.xlu0 %1622
  %1625 = vset.pattern.permute.xlu0 3
  %1626 = vperm.xlu0 %1625, %v29
  %v1627 = vpop.permute.xlu0 %1626
  %1629 = vset.pattern.permute.xlu0 3
  %1630 = vperm.xlu0 %1629, %v30
  %v1631 = vpop.permute.xlu0 %1630
  %1633 = vset.pattern.permute.xlu0 3
  %1634 = vperm.xlu0 %1633, %v31
  %v1635 = vpop.permute.xlu0 %1634
  %1637 = vset.pattern.permute.xlu0 3
  %1638 = vperm.xlu0 %1637, %v32
  %v1639 = vpop.permute.xlu0 %1638
  %1641 = vset.pattern.permute.xlu0 3
  %1642 = vperm.xlu0 %1641, %v33
  %v1643 = vpop.permute.xlu0 %1642
  %1645 = vset.pattern.permute.xlu0 3
  %1646 = vperm.xlu0 %1645, %v34
  %v1647 = vpop.permute.xlu0 %1646
  %1649 = vset.pattern.permute.xlu0 3
  %1650 = vperm.xlu0 %1649, %v35
  %v1651 = vpop.permute.xlu0 %1650
  %1653 = vset.pattern.permute.xlu0 3
  %1654 = vperm.xlu0 %1653, %v36
  %v1655 = vpop.permute.xlu0 %1654
  %1657 = vset.pattern.permute.xlu0 3
  %1658 = vperm.xlu0 %1657, %v37
  %v1659 = vpop.permute.xlu0 %1658
  %1661 = vset.pattern.permute.xlu0 3
  %1662 = vperm.xlu0 %1661, %v38
  %v1663 = vpop.permute.xlu0 %1662
  %1665 = vset.pattern.permute.xlu0 3
  %1666 = vperm.xlu0 %1665, %v39
  %v1667 = vpop.permute.xlu0 %1666
  %1669 = vset.pattern.permute.xlu0 3
  %1670 = vperm.xlu0 %1669, %v40
  %v1671 = vpop.permute.xlu0 %1670
  %1673 = vset.pattern.permute.xlu0 3
  %1674 = vperm.xlu0 %1673, %v41
  %v1675 = vpop.permute.xlu0 %1674
  %1677 = vset.pattern.permute.xlu0 3
  %1678 = vperm.xlu0 %1677, %v42
  %v1679 = vpop.permute.xlu0 %1678
  %v1682 = vlaneseq
  %v1683 = vshrl.u32 %v1682, 7
  %v1684 = vsub.s32 0, %v1683
  %v1685 = vrot.slane %v49, %v1684
  %v1686 = vlaneseq
  %v1687 = vshrl.u32 %v1686, 7
  %v1688 = vsub.s32 1, %v1687
  %v1689 = vrot.slane %v49, %v1688
  %v1690 = vlaneseq
  %v1691 = vshrl.u32 %v1690, 7
  %v1692 = vsub.s32 2, %v1691
  %v1693 = vrot.slane %v49, %v1692
  %v1694 = vlaneseq
  %v1695 = vshrl.u32 %v1694, 7
  %v1696 = vsub.s32 3, %v1695
  %v1697 = vrot.slane %v49, %v1696
  %vm1702 = vcmp.eq.f32.partialorder %v1555, %v1685
  %vm1703 = vcmp.eq.f32.partialorder %v1555, %v1689
  %vm1704 = vcmp.eq.f32.partialorder %v1555, %v1693
  %vm1705 = vcmp.eq.f32.partialorder %v1555, %v1697
  %vm1706 = vcmp.eq.f32.partialorder %v1559, %v1685
  %vm1707 = vcmp.eq.f32.partialorder %v1559, %v1689
  %vm1708 = vcmp.eq.f32.partialorder %v1559, %v1693
  %vm1709 = vcmp.eq.f32.partialorder %v1559, %v1697
  %vm1710 = vcmp.eq.f32.partialorder %v1563, %v1685
  %vm1711 = vcmp.eq.f32.partialorder %v1563, %v1689
  %vm1712 = vcmp.eq.f32.partialorder %v1563, %v1693
  %vm1713 = vcmp.eq.f32.partialorder %v1563, %v1697
  %vm1714 = vcmp.eq.f32.partialorder %v1567, %v1685
  %vm1715 = vcmp.eq.f32.partialorder %v1567, %v1689
  %vm1716 = vcmp.eq.f32.partialorder %v1567, %v1693
  %vm1717 = vcmp.eq.f32.partialorder %v1567, %v1697
  %vm1718 = vcmp.eq.f32.partialorder %v1571, %v1685
  %vm1719 = vcmp.eq.f32.partialorder %v1571, %v1689
  %vm1720 = vcmp.eq.f32.partialorder %v1571, %v1693
  %vm1721 = vcmp.eq.f32.partialorder %v1571, %v1697
  %vm1722 = vcmp.eq.f32.partialorder %v1575, %v1685
  %vm1723 = vcmp.eq.f32.partialorder %v1575, %v1689
  %vm1724 = vcmp.eq.f32.partialorder %v1575, %v1693
  %vm1725 = vcmp.eq.f32.partialorder %v1575, %v1697
  %vm1726 = vcmp.eq.f32.partialorder %v1579, %v1685
  %vm1727 = vcmp.eq.f32.partialorder %v1579, %v1689
  %vm1728 = vcmp.eq.f32.partialorder %v1579, %v1693
  %vm1729 = vcmp.eq.f32.partialorder %v1579, %v1697
  %vm1730 = vcmp.eq.f32.partialorder %v1583, %v1685
  %vm1731 = vcmp.eq.f32.partialorder %v1583, %v1689
  %vm1732 = vcmp.eq.f32.partialorder %v1583, %v1693
  %vm1733 = vcmp.eq.f32.partialorder %v1583, %v1697
  %vm1734 = vcmp.eq.f32.partialorder %v1587, %v1685
  %vm1735 = vcmp.eq.f32.partialorder %v1587, %v1689
  %vm1736 = vcmp.eq.f32.partialorder %v1587, %v1693
  %vm1737 = vcmp.eq.f32.partialorder %v1587, %v1697
  %vm1738 = vcmp.eq.f32.partialorder %v1591, %v1685
  %vm1739 = vcmp.eq.f32.partialorder %v1591, %v1689
  %vm1740 = vcmp.eq.f32.partialorder %v1591, %v1693
  %vm1741 = vcmp.eq.f32.partialorder %v1591, %v1697
  %vm1742 = vcmp.eq.f32.partialorder %v1595, %v1685
  %vm1743 = vcmp.eq.f32.partialorder %v1595, %v1689
  %vm1744 = vcmp.eq.f32.partialorder %v1595, %v1693
  %vm1745 = vcmp.eq.f32.partialorder %v1595, %v1697
  %vm1746 = vcmp.eq.f32.partialorder %v1599, %v1685
  %vm1747 = vcmp.eq.f32.partialorder %v1599, %v1689
  %vm1748 = vcmp.eq.f32.partialorder %v1599, %v1693
  %vm1749 = vcmp.eq.f32.partialorder %v1599, %v1697
  %vm1750 = vcmp.eq.f32.partialorder %v1603, %v1685
  %vm1751 = vcmp.eq.f32.partialorder %v1603, %v1689
  %vm1752 = vcmp.eq.f32.partialorder %v1603, %v1693
  %vm1753 = vcmp.eq.f32.partialorder %v1603, %v1697
  %vm1754 = vcmp.eq.f32.partialorder %v1607, %v1685
  %vm1755 = vcmp.eq.f32.partialorder %v1607, %v1689
  %vm1756 = vcmp.eq.f32.partialorder %v1607, %v1693
  %vm1757 = vcmp.eq.f32.partialorder %v1607, %v1697
  %vm1758 = vcmp.eq.f32.partialorder %v1611, %v1685
  %vm1759 = vcmp.eq.f32.partialorder %v1611, %v1689
  %vm1760 = vcmp.eq.f32.partialorder %v1611, %v1693
  %vm1761 = vcmp.eq.f32.partialorder %v1611, %v1697
  %vm1762 = vcmp.eq.f32.partialorder %v1615, %v1685
  %vm1763 = vcmp.eq.f32.partialorder %v1615, %v1689
  %vm1764 = vcmp.eq.f32.partialorder %v1615, %v1693
  %vm1765 = vcmp.eq.f32.partialorder %v1615, %v1697
  %vm1766 = vcmp.eq.f32.partialorder %v1619, %v1685
  %vm1767 = vcmp.eq.f32.partialorder %v1619, %v1689
  %vm1768 = vcmp.eq.f32.partialorder %v1619, %v1693
  %vm1769 = vcmp.eq.f32.partialorder %v1619, %v1697
  %vm1770 = vcmp.eq.f32.partialorder %v1623, %v1685
  %vm1771 = vcmp.eq.f32.partialorder %v1623, %v1689
  %vm1772 = vcmp.eq.f32.partialorder %v1623, %v1693
  %vm1773 = vcmp.eq.f32.partialorder %v1623, %v1697
  %vm1774 = vcmp.eq.f32.partialorder %v1627, %v1685
  %vm1775 = vcmp.eq.f32.partialorder %v1627, %v1689
  %vm1776 = vcmp.eq.f32.partialorder %v1627, %v1693
  %vm1777 = vcmp.eq.f32.partialorder %v1627, %v1697
  %vm1778 = vcmp.eq.f32.partialorder %v1631, %v1685
  %vm1779 = vcmp.eq.f32.partialorder %v1631, %v1689
  %vm1780 = vcmp.eq.f32.partialorder %v1631, %v1693
  %vm1781 = vcmp.eq.f32.partialorder %v1631, %v1697
  %vm1782 = vcmp.eq.f32.partialorder %v1635, %v1685
  %vm1783 = vcmp.eq.f32.partialorder %v1635, %v1689
  %vm1784 = vcmp.eq.f32.partialorder %v1635, %v1693
  %vm1785 = vcmp.eq.f32.partialorder %v1635, %v1697
  %vm1786 = vcmp.eq.f32.partialorder %v1639, %v1685
  %vm1787 = vcmp.eq.f32.partialorder %v1639, %v1689
  %vm1788 = vcmp.eq.f32.partialorder %v1639, %v1693
  %vm1789 = vcmp.eq.f32.partialorder %v1639, %v1697
  %vm1790 = vcmp.eq.f32.partialorder %v1643, %v1685
  %vm1791 = vcmp.eq.f32.partialorder %v1643, %v1689
  %vm1792 = vcmp.eq.f32.partialorder %v1643, %v1693
  %vm1793 = vcmp.eq.f32.partialorder %v1643, %v1697
  %vm1794 = vcmp.eq.f32.partialorder %v1647, %v1685
  %vm1795 = vcmp.eq.f32.partialorder %v1647, %v1689
  %vm1796 = vcmp.eq.f32.partialorder %v1647, %v1693
  %vm1797 = vcmp.eq.f32.partialorder %v1647, %v1697
  %vm1798 = vcmp.eq.f32.partialorder %v1651, %v1685
  %vm1799 = vcmp.eq.f32.partialorder %v1651, %v1689
  %vm1800 = vcmp.eq.f32.partialorder %v1651, %v1693
  %vm1801 = vcmp.eq.f32.partialorder %v1651, %v1697
  %vm1802 = vcmp.eq.f32.partialorder %v1655, %v1685
  %vm1803 = vcmp.eq.f32.partialorder %v1655, %v1689
  %vm1804 = vcmp.eq.f32.partialorder %v1655, %v1693
  %vm1805 = vcmp.eq.f32.partialorder %v1655, %v1697
  %vm1806 = vcmp.eq.f32.partialorder %v1659, %v1685
  %vm1807 = vcmp.eq.f32.partialorder %v1659, %v1689
  %vm1808 = vcmp.eq.f32.partialorder %v1659, %v1693
  %vm1809 = vcmp.eq.f32.partialorder %v1659, %v1697
  %vm1810 = vcmp.eq.f32.partialorder %v1663, %v1685
  %vm1811 = vcmp.eq.f32.partialorder %v1663, %v1689
  %vm1812 = vcmp.eq.f32.partialorder %v1663, %v1693
  %vm1813 = vcmp.eq.f32.partialorder %v1663, %v1697
  %vm1814 = vcmp.eq.f32.partialorder %v1667, %v1685
  %vm1815 = vcmp.eq.f32.partialorder %v1667, %v1689
  %vm1816 = vcmp.eq.f32.partialorder %v1667, %v1693
  %vm1817 = vcmp.eq.f32.partialorder %v1667, %v1697
  %vm1818 = vcmp.eq.f32.partialorder %v1671, %v1685
  %vm1819 = vcmp.eq.f32.partialorder %v1671, %v1689
  %vm1820 = vcmp.eq.f32.partialorder %v1671, %v1693
  %vm1821 = vcmp.eq.f32.partialorder %v1671, %v1697
  %vm1822 = vcmp.eq.f32.partialorder %v1675, %v1685
  %vm1823 = vcmp.eq.f32.partialorder %v1675, %v1689
  %vm1824 = vcmp.eq.f32.partialorder %v1675, %v1693
  %vm1825 = vcmp.eq.f32.partialorder %v1675, %v1697
  %vm1826 = vcmp.eq.f32.partialorder %v1679, %v1685
  %vm1827 = vcmp.eq.f32.partialorder %v1679, %v1689
  %vm1828 = vcmp.eq.f32.partialorder %v1679, %v1693
  %vm1829 = vcmp.eq.f32.partialorder %v1679, %v1697
  %vm1830 = vcmp.le.f32.partialorder %v1425, 9.0
  %vm1831 = vcmp.le.f32.partialorder %v1426, 9.0
  %vm1832 = vcmp.le.f32.partialorder %v1427, 9.0
  %vm1833 = vcmp.le.f32.partialorder %v1428, 9.0
  %vm1834 = vcmp.le.f32.partialorder %v1429, 9.0
  %vm1835 = vcmp.le.f32.partialorder %v1430, 9.0
  %vm1836 = vcmp.le.f32.partialorder %v1431, 9.0
  %vm1837 = vcmp.le.f32.partialorder %v1432, 9.0
  %vm1838 = vcmp.le.f32.partialorder %v1433, 9.0
  %vm1839 = vcmp.le.f32.partialorder %v1434, 9.0
  %vm1840 = vcmp.le.f32.partialorder %v1435, 9.0
  %vm1841 = vcmp.le.f32.partialorder %v1436, 9.0
  %vm1842 = vcmp.le.f32.partialorder %v1437, 9.0
  %vm1843 = vcmp.le.f32.partialorder %v1438, 9.0
  %vm1844 = vcmp.le.f32.partialorder %v1439, 9.0
  %vm1845 = vcmp.le.f32.partialorder %v1440, 9.0
  %vm1846 = vcmp.le.f32.partialorder %v1441, 9.0
  %vm1847 = vcmp.le.f32.partialorder %v1442, 9.0
  %vm1848 = vcmp.le.f32.partialorder %v1443, 9.0
  %vm1849 = vcmp.le.f32.partialorder %v1444, 9.0
  %vm1850 = vcmp.le.f32.partialorder %v1445, 9.0
  %vm1851 = vcmp.le.f32.partialorder %v1446, 9.0
  %vm1852 = vcmp.le.f32.partialorder %v1447, 9.0
  %vm1853 = vcmp.le.f32.partialorder %v1448, 9.0
  %vm1854 = vcmp.le.f32.partialorder %v1449, 9.0
  %vm1855 = vcmp.le.f32.partialorder %v1450, 9.0
  %vm1856 = vcmp.le.f32.partialorder %v1451, 9.0
  %vm1857 = vcmp.le.f32.partialorder %v1452, 9.0
  %vm1858 = vcmp.le.f32.partialorder %v1453, 9.0
  %vm1859 = vcmp.le.f32.partialorder %v1454, 9.0
  %vm1860 = vcmp.le.f32.partialorder %v1455, 9.0
  %vm1861 = vcmp.le.f32.partialorder %v1456, 9.0
  %vm1862 = vcmp.le.f32.partialorder %v1457, 9.0
  %vm1863 = vcmp.le.f32.partialorder %v1458, 9.0
  %vm1864 = vcmp.le.f32.partialorder %v1459, 9.0
  %vm1865 = vcmp.le.f32.partialorder %v1460, 9.0
  %vm1866 = vcmp.le.f32.partialorder %v1461, 9.0
  %vm1867 = vcmp.le.f32.partialorder %v1462, 9.0
  %vm1868 = vcmp.le.f32.partialorder %v1463, 9.0
  %vm1869 = vcmp.le.f32.partialorder %v1464, 9.0
  %vm1870 = vcmp.le.f32.partialorder %v1465, 9.0
  %vm1871 = vcmp.le.f32.partialorder %v1466, 9.0
  %vm1872 = vcmp.le.f32.partialorder %v1467, 9.0
  %vm1873 = vcmp.le.f32.partialorder %v1468, 9.0
  %vm1874 = vcmp.le.f32.partialorder %v1469, 9.0
  %vm1875 = vcmp.le.f32.partialorder %v1470, 9.0
  %vm1876 = vcmp.le.f32.partialorder %v1471, 9.0
  %vm1877 = vcmp.le.f32.partialorder %v1472, 9.0
  %vm1878 = vcmp.le.f32.partialorder %v1473, 9.0
  %vm1879 = vcmp.le.f32.partialorder %v1474, 9.0
  %vm1880 = vcmp.le.f32.partialorder %v1475, 9.0
  %vm1881 = vcmp.le.f32.partialorder %v1476, 9.0
  %vm1882 = vcmp.le.f32.partialorder %v1477, 9.0
  %vm1883 = vcmp.le.f32.partialorder %v1478, 9.0
  %vm1884 = vcmp.le.f32.partialorder %v1479, 9.0
  %vm1885 = vcmp.le.f32.partialorder %v1480, 9.0
  %vm1886 = vcmp.le.f32.partialorder %v1481, 9.0
  %vm1887 = vcmp.le.f32.partialorder %v1482, 9.0
  %vm1888 = vcmp.le.f32.partialorder %v1483, 9.0
  %vm1889 = vcmp.le.f32.partialorder %v1484, 9.0
  %vm1890 = vcmp.le.f32.partialorder %v1485, 9.0
  %vm1891 = vcmp.le.f32.partialorder %v1486, 9.0
  %vm1892 = vcmp.le.f32.partialorder %v1487, 9.0
  %vm1893 = vcmp.le.f32.partialorder %v1488, 9.0
  %vm1894 = vcmp.le.f32.partialorder %v1489, 9.0
  %vm1895 = vcmp.le.f32.partialorder %v1490, 9.0
  %vm1896 = vcmp.le.f32.partialorder %v1491, 9.0
  %vm1897 = vcmp.le.f32.partialorder %v1492, 9.0
  %vm1898 = vcmp.le.f32.partialorder %v1493, 9.0
  %vm1899 = vcmp.le.f32.partialorder %v1494, 9.0
  %vm1900 = vcmp.le.f32.partialorder %v1495, 9.0
  %vm1901 = vcmp.le.f32.partialorder %v1496, 9.0
  %vm1902 = vcmp.le.f32.partialorder %v1497, 9.0
  %vm1903 = vcmp.le.f32.partialorder %v1498, 9.0
  %vm1904 = vcmp.le.f32.partialorder %v1499, 9.0
  %vm1905 = vcmp.le.f32.partialorder %v1500, 9.0
  %vm1906 = vcmp.le.f32.partialorder %v1501, 9.0
  %vm1907 = vcmp.le.f32.partialorder %v1502, 9.0
  %vm1908 = vcmp.le.f32.partialorder %v1503, 9.0
  %vm1909 = vcmp.le.f32.partialorder %v1504, 9.0
  %vm1910 = vcmp.le.f32.partialorder %v1505, 9.0
  %vm1911 = vcmp.le.f32.partialorder %v1506, 9.0
  %vm1912 = vcmp.le.f32.partialorder %v1507, 9.0
  %vm1913 = vcmp.le.f32.partialorder %v1508, 9.0
  %vm1914 = vcmp.le.f32.partialorder %v1509, 9.0
  %vm1915 = vcmp.le.f32.partialorder %v1510, 9.0
  %vm1916 = vcmp.le.f32.partialorder %v1511, 9.0
  %vm1917 = vcmp.le.f32.partialorder %v1512, 9.0
  %vm1918 = vcmp.le.f32.partialorder %v1513, 9.0
  %vm1919 = vcmp.le.f32.partialorder %v1514, 9.0
  %vm1920 = vcmp.le.f32.partialorder %v1515, 9.0
  %vm1921 = vcmp.le.f32.partialorder %v1516, 9.0
  %vm1922 = vcmp.le.f32.partialorder %v1517, 9.0
  %vm1923 = vcmp.le.f32.partialorder %v1518, 9.0
  %vm1924 = vcmp.le.f32.partialorder %v1519, 9.0
  %vm1925 = vcmp.le.f32.partialorder %v1520, 9.0
  %vm1926 = vcmp.le.f32.partialorder %v1521, 9.0
  %vm1927 = vcmp.le.f32.partialorder %v1522, 9.0
  %vm1928 = vcmp.le.f32.partialorder %v1523, 9.0
  %vm1929 = vcmp.le.f32.partialorder %v1524, 9.0
  %vm1930 = vcmp.le.f32.partialorder %v1525, 9.0
  %vm1931 = vcmp.le.f32.partialorder %v1526, 9.0
  %vm1932 = vcmp.le.f32.partialorder %v1527, 9.0
  %vm1933 = vcmp.le.f32.partialorder %v1528, 9.0
  %vm1934 = vcmp.le.f32.partialorder %v1529, 9.0
  %vm1935 = vcmp.le.f32.partialorder %v1530, 9.0
  %vm1936 = vcmp.le.f32.partialorder %v1531, 9.0
  %vm1937 = vcmp.le.f32.partialorder %v1532, 9.0
  %vm1938 = vcmp.le.f32.partialorder %v1533, 9.0
  %vm1939 = vcmp.le.f32.partialorder %v1534, 9.0
  %vm1940 = vcmp.le.f32.partialorder %v1535, 9.0
  %vm1941 = vcmp.le.f32.partialorder %v1536, 9.0
  %vm1942 = vcmp.le.f32.partialorder %v1537, 9.0
  %vm1943 = vcmp.le.f32.partialorder %v1538, 9.0
  %vm1944 = vcmp.le.f32.partialorder %v1539, 9.0
  %vm1945 = vcmp.le.f32.partialorder %v1540, 9.0
  %vm1946 = vcmp.le.f32.partialorder %v1541, 9.0
  %vm1947 = vcmp.le.f32.partialorder %v1542, 9.0
  %vm1948 = vcmp.le.f32.partialorder %v1543, 9.0
  %vm1949 = vcmp.le.f32.partialorder %v1544, 9.0
  %vm1950 = vcmp.le.f32.partialorder %v1545, 9.0
  %vm1951 = vcmp.le.f32.partialorder %v1546, 9.0
  %vm1952 = vcmp.le.f32.partialorder %v1547, 9.0
  %vm1953 = vcmp.le.f32.partialorder %v1548, 9.0
  %vm1954 = vcmp.le.f32.partialorder %v1549, 9.0
  %vm1955 = vcmp.le.f32.partialorder %v1550, 9.0
  %vm1956 = vcmp.le.f32.partialorder %v1551, 9.0
  %vm1957 = vcmp.le.f32.partialorder %v1552, 9.0
  %vm1958 = vmand %vm1702, %vm1830
  %vm1959 = vmand %vm1703, %vm1831
  %vm1960 = vmand %vm1704, %vm1832
  %vm1961 = vmand %vm1705, %vm1833
  %vm1962 = vmand %vm1706, %vm1834
  %vm1963 = vmand %vm1707, %vm1835
  %vm1964 = vmand %vm1708, %vm1836
  %vm1965 = vmand %vm1709, %vm1837
  %vm1966 = vmand %vm1710, %vm1838
  %vm1967 = vmand %vm1711, %vm1839
  %vm1968 = vmand %vm1712, %vm1840
  %vm1969 = vmand %vm1713, %vm1841
  %vm1970 = vmand %vm1714, %vm1842
  %vm1971 = vmand %vm1715, %vm1843
  %vm1972 = vmand %vm1716, %vm1844
  %vm1973 = vmand %vm1717, %vm1845
  %vm1974 = vmand %vm1718, %vm1846
  %vm1975 = vmand %vm1719, %vm1847
  %vm1976 = vmand %vm1720, %vm1848
  %vm1977 = vmand %vm1721, %vm1849
  %vm1978 = vmand %vm1722, %vm1850
  %vm1979 = vmand %vm1723, %vm1851
  %vm1980 = vmand %vm1724, %vm1852
  %vm1981 = vmand %vm1725, %vm1853
  %vm1982 = vmand %vm1726, %vm1854
  %vm1983 = vmand %vm1727, %vm1855
  %vm1984 = vmand %vm1728, %vm1856
  %vm1985 = vmand %vm1729, %vm1857
  %vm1986 = vmand %vm1730, %vm1858
  %vm1987 = vmand %vm1731, %vm1859
  %vm1988 = vmand %vm1732, %vm1860
  %vm1989 = vmand %vm1733, %vm1861
  %vm1990 = vmand %vm1734, %vm1862
  %vm1991 = vmand %vm1735, %vm1863
  %vm1992 = vmand %vm1736, %vm1864
  %vm1993 = vmand %vm1737, %vm1865
  %vm1994 = vmand %vm1738, %vm1866
  %vm1995 = vmand %vm1739, %vm1867
  %vm1996 = vmand %vm1740, %vm1868
  %vm1997 = vmand %vm1741, %vm1869
  %vm1998 = vmand %vm1742, %vm1870
  %vm1999 = vmand %vm1743, %vm1871
  %vm2000 = vmand %vm1744, %vm1872
  %vm2001 = vmand %vm1745, %vm1873
  %vm2002 = vmand %vm1746, %vm1874
  %vm2003 = vmand %vm1747, %vm1875
  %vm2004 = vmand %vm1748, %vm1876
  %vm2005 = vmand %vm1749, %vm1877
  %vm2006 = vmand %vm1750, %vm1878
  %vm2007 = vmand %vm1751, %vm1879
  %vm2008 = vmand %vm1752, %vm1880
  %vm2009 = vmand %vm1753, %vm1881
  %vm2010 = vmand %vm1754, %vm1882
  %vm2011 = vmand %vm1755, %vm1883
  %vm2012 = vmand %vm1756, %vm1884
  %vm2013 = vmand %vm1757, %vm1885
  %vm2014 = vmand %vm1758, %vm1886
  %vm2015 = vmand %vm1759, %vm1887
  %vm2016 = vmand %vm1760, %vm1888
  %vm2017 = vmand %vm1761, %vm1889
  %vm2018 = vmand %vm1762, %vm1890
  %vm2019 = vmand %vm1763, %vm1891
  %vm2020 = vmand %vm1764, %vm1892
  %vm2021 = vmand %vm1765, %vm1893
  %vm2022 = vmand %vm1766, %vm1894
  %vm2023 = vmand %vm1767, %vm1895
  %vm2024 = vmand %vm1768, %vm1896
  %vm2025 = vmand %vm1769, %vm1897
  %vm2026 = vmand %vm1770, %vm1898
  %vm2027 = vmand %vm1771, %vm1899
  %vm2028 = vmand %vm1772, %vm1900
  %vm2029 = vmand %vm1773, %vm1901
  %vm2030 = vmand %vm1774, %vm1902
  %vm2031 = vmand %vm1775, %vm1903
  %vm2032 = vmand %vm1776, %vm1904
  %vm2033 = vmand %vm1777, %vm1905
  %vm2034 = vmand %vm1778, %vm1906
  %vm2035 = vmand %vm1779, %vm1907
  %vm2036 = vmand %vm1780, %vm1908
  %vm2037 = vmand %vm1781, %vm1909
  %vm2038 = vmand %vm1782, %vm1910
  %vm2039 = vmand %vm1783, %vm1911
  %vm2040 = vmand %vm1784, %vm1912
  %vm2041 = vmand %vm1785, %vm1913
  %vm2042 = vmand %vm1786, %vm1914
  %vm2043 = vmand %vm1787, %vm1915
  %vm2044 = vmand %vm1788, %vm1916
  %vm2045 = vmand %vm1789, %vm1917
  %vm2046 = vmand %vm1790, %vm1918
  %vm2047 = vmand %vm1791, %vm1919
  %vm2048 = vmand %vm1792, %vm1920
  %vm2049 = vmand %vm1793, %vm1921
  %vm2050 = vmand %vm1794, %vm1922
  %vm2051 = vmand %vm1795, %vm1923
  %vm2052 = vmand %vm1796, %vm1924
  %vm2053 = vmand %vm1797, %vm1925
  %vm2054 = vmand %vm1798, %vm1926
  %vm2055 = vmand %vm1799, %vm1927
  %vm2056 = vmand %vm1800, %vm1928
  %vm2057 = vmand %vm1801, %vm1929
  %vm2058 = vmand %vm1802, %vm1930
  %vm2059 = vmand %vm1803, %vm1931
  %vm2060 = vmand %vm1804, %vm1932
  %vm2061 = vmand %vm1805, %vm1933
  %vm2062 = vmand %vm1806, %vm1934
  %vm2063 = vmand %vm1807, %vm1935
  %vm2064 = vmand %vm1808, %vm1936
  %vm2065 = vmand %vm1809, %vm1937
  %vm2066 = vmand %vm1810, %vm1938
  %vm2067 = vmand %vm1811, %vm1939
  %vm2068 = vmand %vm1812, %vm1940
  %vm2069 = vmand %vm1813, %vm1941
  %vm2070 = vmand %vm1814, %vm1942
  %vm2071 = vmand %vm1815, %vm1943
  %vm2072 = vmand %vm1816, %vm1944
  %vm2073 = vmand %vm1817, %vm1945
  %vm2074 = vmand %vm1818, %vm1946
  %vm2075 = vmand %vm1819, %vm1947
  %vm2076 = vmand %vm1820, %vm1948
  %vm2077 = vmand %vm1821, %vm1949
  %vm2078 = vmand %vm1822, %vm1950
  %vm2079 = vmand %vm1823, %vm1951
  %vm2080 = vmand %vm1824, %vm1952
  %vm2081 = vmand %vm1825, %vm1953
  %vm2082 = vmand %vm1826, %vm1954
  %vm2083 = vmand %vm1827, %vm1955
  %vm2084 = vmand %vm1828, %vm1956
  %vm2085 = vmand %vm1829, %vm1957
  %s2086 = smul.u32 0, 256
  %s2087 = smul.u32 0, 512
  %s2088 = ssub.s32 512, %s2087
  %v2089 = vlaneseq
  %v2090 = vand.u32 %v2089, 127
  %v2091 = vadd.s32 %v2090, 128
  %v2092 = vadd.s32 %v2090, 256
  %v2093 = vadd.s32 %v2090, 384
  %v2094 = vstv %s2088
  %v2095 = vsub.s32 %v2094, %v2090
  %v2096 = vsub.s32 %v2094, %v2091
  %v2097 = vsub.s32 %v2094, %v2092
  %v2098 = vsub.s32 %v2094, %v2093
  %s2099 = sadd.s32 %s2087, 512
  %p2100 = scmp.lt.s32.totalorder %s2086, %s2099
  %s2101 = sadd.s32 %s2086, 256
  %p2102 = scmp.lt.s32.totalorder %s2087, %s2101
  %p2103 = pnand %p2100, %p2102
  %p2104 = pneg %p2103
  // Predicated region
  $region10: #{radius_interaction_graph.1} parent=0 // pred_check
    _
  $region11: #{radius_interaction_graph.1} parent=0 // pred_check_branch
    %2106 = sbr.rel (%p2103) target = $region13
  $region12: #{radius_interaction_graph.1} parent=0 // pred_region
    %v2107 = vlaneseq
    %v2108 = vshrl.u32 %v2107, 7
    %v2109 = vadd.s32 %v2108, 8
    %v2110 = vadd.s32 %v2108, 16
    %v2111 = vadd.s32 %v2108, 24
    %v2112 = vadd.s32 %v2108, 32
    %v2113 = vadd.s32 %v2108, 40
    %v2114 = vadd.s32 %v2108, 48
    %v2115 = vadd.s32 %v2108, 56
    %v2116 = vadd.s32 %v2108, 64
    %v2117 = vadd.s32 %v2108, 72
    %v2118 = vadd.s32 %v2108, 80
    %v2119 = vadd.s32 %v2108, 88
    %v2120 = vadd.s32 %v2108, 96
    %v2121 = vadd.s32 %v2108, 104
    %v2122 = vadd.s32 %v2108, 112
    %v2123 = vadd.s32 %v2108, 120
    %v2124 = vadd.s32 %v2108, 128
    %v2125 = vadd.s32 %v2108, 136
    %v2126 = vadd.s32 %v2108, 144
    %v2127 = vadd.s32 %v2108, 152
    %v2128 = vadd.s32 %v2108, 160
    %v2129 = vadd.s32 %v2108, 168
    %v2130 = vadd.s32 %v2108, 176
    %v2131 = vadd.s32 %v2108, 184
    %v2132 = vadd.s32 %v2108, 192
    %v2133 = vadd.s32 %v2108, 200
    %v2134 = vadd.s32 %v2108, 208
    %v2135 = vadd.s32 %v2108, 216
    %v2136 = vadd.s32 %v2108, 224
    %v2137 = vadd.s32 %v2108, 232
    %v2138 = vadd.s32 %v2108, 240
    %v2139 = vadd.s32 %v2108, 248
    %v2140 = vstv %s2086
    %v2141 = vadd.s32 %v2140, %v2108
    %v2142 = vadd.s32 %v2140, %v2109
    %v2143 = vadd.s32 %v2140, %v2110
    %v2144 = vadd.s32 %v2140, %v2111
    %v2145 = vadd.s32 %v2140, %v2112
    %v2146 = vadd.s32 %v2140, %v2113
    %v2147 = vadd.s32 %v2140, %v2114
    %v2148 = vadd.s32 %v2140, %v2115
    %v2149 = vadd.s32 %v2140, %v2116
    %v2150 = vadd.s32 %v2140, %v2117
    %v2151 = vadd.s32 %v2140, %v2118
    %v2152 = vadd.s32 %v2140, %v2119
    %v2153 = vadd.s32 %v2140, %v2120
    %v2154 = vadd.s32 %v2140, %v2121
    %v2155 = vadd.s32 %v2140, %v2122
    %v2156 = vadd.s32 %v2140, %v2123
    %v2157 = vadd.s32 %v2140, %v2124
    %v2158 = vadd.s32 %v2140, %v2125
    %v2159 = vadd.s32 %v2140, %v2126
    %v2160 = vadd.s32 %v2140, %v2127
    %v2161 = vadd.s32 %v2140, %v2128
    %v2162 = vadd.s32 %v2140, %v2129
    %v2163 = vadd.s32 %v2140, %v2130
    %v2164 = vadd.s32 %v2140, %v2131
    %v2165 = vadd.s32 %v2140, %v2132
    %v2166 = vadd.s32 %v2140, %v2133
    %v2167 = vadd.s32 %v2140, %v2134
    %v2168 = vadd.s32 %v2140, %v2135
    %v2169 = vadd.s32 %v2140, %v2136
    %v2170 = vadd.s32 %v2140, %v2137
    %v2171 = vadd.s32 %v2140, %v2138
    %v2172 = vadd.s32 %v2140, %v2139
    %v2173 = vstv %s2087
    %v2174 = vadd.s32 %v2173, %v2090
    %v2175 = vadd.s32 %v2173, %v2091
    %v2176 = vadd.s32 %v2173, %v2092
    %v2177 = vadd.s32 %v2173, %v2093
    %vm2178 = vcmp.ne.s32.totalorder %v2141, %v2174
    %vm2179 = vcmp.ne.s32.totalorder %v2141, %v2175
    %vm2180 = vcmp.ne.s32.totalorder %v2141, %v2176
    %vm2181 = vcmp.ne.s32.totalorder %v2141, %v2177
    %vm2182 = vcmp.ne.s32.totalorder %v2142, %v2174
    %vm2183 = vcmp.ne.s32.totalorder %v2142, %v2175
    %vm2184 = vcmp.ne.s32.totalorder %v2142, %v2176
    %vm2185 = vcmp.ne.s32.totalorder %v2142, %v2177
    %vm2186 = vcmp.ne.s32.totalorder %v2143, %v2174
    %vm2187 = vcmp.ne.s32.totalorder %v2143, %v2175
    %vm2188 = vcmp.ne.s32.totalorder %v2143, %v2176
    %vm2189 = vcmp.ne.s32.totalorder %v2143, %v2177
    %vm2190 = vcmp.ne.s32.totalorder %v2144, %v2174
    %vm2191 = vcmp.ne.s32.totalorder %v2144, %v2175
    %vm2192 = vcmp.ne.s32.totalorder %v2144, %v2176
    %vm2193 = vcmp.ne.s32.totalorder %v2144, %v2177
    %vm2194 = vcmp.ne.s32.totalorder %v2145, %v2174
    %vm2195 = vcmp.ne.s32.totalorder %v2145, %v2175
    %vm2196 = vcmp.ne.s32.totalorder %v2145, %v2176
    %vm2197 = vcmp.ne.s32.totalorder %v2145, %v2177
    %vm2198 = vcmp.ne.s32.totalorder %v2146, %v2174
    %vm2199 = vcmp.ne.s32.totalorder %v2146, %v2175
    %vm2200 = vcmp.ne.s32.totalorder %v2146, %v2176
    %vm2201 = vcmp.ne.s32.totalorder %v2146, %v2177
    %vm2202 = vcmp.ne.s32.totalorder %v2147, %v2174
    %vm2203 = vcmp.ne.s32.totalorder %v2147, %v2175
    %vm2204 = vcmp.ne.s32.totalorder %v2147, %v2176
    %vm2205 = vcmp.ne.s32.totalorder %v2147, %v2177
    %vm2206 = vcmp.ne.s32.totalorder %v2148, %v2174
    %vm2207 = vcmp.ne.s32.totalorder %v2148, %v2175
    %vm2208 = vcmp.ne.s32.totalorder %v2148, %v2176
    %vm2209 = vcmp.ne.s32.totalorder %v2148, %v2177
    %vm2210 = vcmp.ne.s32.totalorder %v2149, %v2174
    %vm2211 = vcmp.ne.s32.totalorder %v2149, %v2175
    %vm2212 = vcmp.ne.s32.totalorder %v2149, %v2176
    %vm2213 = vcmp.ne.s32.totalorder %v2149, %v2177
    %vm2214 = vcmp.ne.s32.totalorder %v2150, %v2174
    %vm2215 = vcmp.ne.s32.totalorder %v2150, %v2175
    %vm2216 = vcmp.ne.s32.totalorder %v2150, %v2176
    %vm2217 = vcmp.ne.s32.totalorder %v2150, %v2177
    %vm2218 = vcmp.ne.s32.totalorder %v2151, %v2174
    %vm2219 = vcmp.ne.s32.totalorder %v2151, %v2175
    %vm2220 = vcmp.ne.s32.totalorder %v2151, %v2176
    %vm2221 = vcmp.ne.s32.totalorder %v2151, %v2177
    %vm2222 = vcmp.ne.s32.totalorder %v2152, %v2174
    %vm2223 = vcmp.ne.s32.totalorder %v2152, %v2175
    %vm2224 = vcmp.ne.s32.totalorder %v2152, %v2176
    %vm2225 = vcmp.ne.s32.totalorder %v2152, %v2177
    %vm2226 = vcmp.ne.s32.totalorder %v2153, %v2174
    %vm2227 = vcmp.ne.s32.totalorder %v2153, %v2175
    %vm2228 = vcmp.ne.s32.totalorder %v2153, %v2176
    %vm2229 = vcmp.ne.s32.totalorder %v2153, %v2177
    %vm2230 = vcmp.ne.s32.totalorder %v2154, %v2174
    %vm2231 = vcmp.ne.s32.totalorder %v2154, %v2175
    %vm2232 = vcmp.ne.s32.totalorder %v2154, %v2176
    %vm2233 = vcmp.ne.s32.totalorder %v2154, %v2177
    %vm2234 = vcmp.ne.s32.totalorder %v2155, %v2174
    %vm2235 = vcmp.ne.s32.totalorder %v2155, %v2175
    %vm2236 = vcmp.ne.s32.totalorder %v2155, %v2176
    %vm2237 = vcmp.ne.s32.totalorder %v2155, %v2177
    %vm2238 = vcmp.ne.s32.totalorder %v2156, %v2174
    %vm2239 = vcmp.ne.s32.totalorder %v2156, %v2175
    %vm2240 = vcmp.ne.s32.totalorder %v2156, %v2176
    %vm2241 = vcmp.ne.s32.totalorder %v2156, %v2177
    %vm2242 = vcmp.ne.s32.totalorder %v2157, %v2174
    %vm2243 = vcmp.ne.s32.totalorder %v2157, %v2175
    %vm2244 = vcmp.ne.s32.totalorder %v2157, %v2176
    %vm2245 = vcmp.ne.s32.totalorder %v2157, %v2177
    %vm2246 = vcmp.ne.s32.totalorder %v2158, %v2174
    %vm2247 = vcmp.ne.s32.totalorder %v2158, %v2175
    %vm2248 = vcmp.ne.s32.totalorder %v2158, %v2176
    %vm2249 = vcmp.ne.s32.totalorder %v2158, %v2177
    %vm2250 = vcmp.ne.s32.totalorder %v2159, %v2174
    %vm2251 = vcmp.ne.s32.totalorder %v2159, %v2175
    %vm2252 = vcmp.ne.s32.totalorder %v2159, %v2176
    %vm2253 = vcmp.ne.s32.totalorder %v2159, %v2177
    %vm2254 = vcmp.ne.s32.totalorder %v2160, %v2174
    %vm2255 = vcmp.ne.s32.totalorder %v2160, %v2175
    %vm2256 = vcmp.ne.s32.totalorder %v2160, %v2176
    %vm2257 = vcmp.ne.s32.totalorder %v2160, %v2177
    %vm2258 = vcmp.ne.s32.totalorder %v2161, %v2174
    %vm2259 = vcmp.ne.s32.totalorder %v2161, %v2175
    %vm2260 = vcmp.ne.s32.totalorder %v2161, %v2176
    %vm2261 = vcmp.ne.s32.totalorder %v2161, %v2177
    %vm2262 = vcmp.ne.s32.totalorder %v2162, %v2174
    %vm2263 = vcmp.ne.s32.totalorder %v2162, %v2175
    %vm2264 = vcmp.ne.s32.totalorder %v2162, %v2176
    %vm2265 = vcmp.ne.s32.totalorder %v2162, %v2177
    %vm2266 = vcmp.ne.s32.totalorder %v2163, %v2174
    %vm2267 = vcmp.ne.s32.totalorder %v2163, %v2175
    %vm2268 = vcmp.ne.s32.totalorder %v2163, %v2176
    %vm2269 = vcmp.ne.s32.totalorder %v2163, %v2177
    %vm2270 = vcmp.ne.s32.totalorder %v2164, %v2174
    %vm2271 = vcmp.ne.s32.totalorder %v2164, %v2175
    %vm2272 = vcmp.ne.s32.totalorder %v2164, %v2176
    %vm2273 = vcmp.ne.s32.totalorder %v2164, %v2177
    %vm2274 = vcmp.ne.s32.totalorder %v2165, %v2174
    %vm2275 = vcmp.ne.s32.totalorder %v2165, %v2175
    %vm2276 = vcmp.ne.s32.totalorder %v2165, %v2176
    %vm2277 = vcmp.ne.s32.totalorder %v2165, %v2177
    %vm2278 = vcmp.ne.s32.totalorder %v2166, %v2174
    %vm2279 = vcmp.ne.s32.totalorder %v2166, %v2175
    %vm2280 = vcmp.ne.s32.totalorder %v2166, %v2176
    %vm2281 = vcmp.ne.s32.totalorder %v2166, %v2177
    %vm2282 = vcmp.ne.s32.totalorder %v2167, %v2174
    %vm2283 = vcmp.ne.s32.totalorder %v2167, %v2175
    %vm2284 = vcmp.ne.s32.totalorder %v2167, %v2176
    %vm2285 = vcmp.ne.s32.totalorder %v2167, %v2177
    %vm2286 = vcmp.ne.s32.totalorder %v2168, %v2174
    %vm2287 = vcmp.ne.s32.totalorder %v2168, %v2175
    %vm2288 = vcmp.ne.s32.totalorder %v2168, %v2176
    %vm2289 = vcmp.ne.s32.totalorder %v2168, %v2177
    %vm2290 = vcmp.ne.s32.totalorder %v2169, %v2174
    %vm2291 = vcmp.ne.s32.totalorder %v2169, %v2175
    %vm2292 = vcmp.ne.s32.totalorder %v2169, %v2176
    %vm2293 = vcmp.ne.s32.totalorder %v2169, %v2177
    %vm2294 = vcmp.ne.s32.totalorder %v2170, %v2174
    %vm2295 = vcmp.ne.s32.totalorder %v2170, %v2175
    %vm2296 = vcmp.ne.s32.totalorder %v2170, %v2176
    %vm2297 = vcmp.ne.s32.totalorder %v2170, %v2177
    %vm2298 = vcmp.ne.s32.totalorder %v2171, %v2174
    %vm2299 = vcmp.ne.s32.totalorder %v2171, %v2175
    %vm2300 = vcmp.ne.s32.totalorder %v2171, %v2176
    %vm2301 = vcmp.ne.s32.totalorder %v2171, %v2177
    %vm2302 = vcmp.ne.s32.totalorder %v2172, %v2174
    %vm2303 = vcmp.ne.s32.totalorder %v2172, %v2175
    %vm2304 = vcmp.ne.s32.totalorder %v2172, %v2176
    %vm2305 = vcmp.ne.s32.totalorder %v2172, %v2177
    %vm2306 = vmand %vm1958, %vm2178
    %vm2307 = vmand %vm1959, %vm2179
    %vm2308 = vmand %vm1960, %vm2180
    %vm2309 = vmand %vm1961, %vm2181
    %vm2310 = vmand %vm1962, %vm2182
    %vm2311 = vmand %vm1963, %vm2183
    %vm2312 = vmand %vm1964, %vm2184
    %vm2313 = vmand %vm1965, %vm2185
    %vm2314 = vmand %vm1966, %vm2186
    %vm2315 = vmand %vm1967, %vm2187
    %vm2316 = vmand %vm1968, %vm2188
    %vm2317 = vmand %vm1969, %vm2189
    %vm2318 = vmand %vm1970, %vm2190
    %vm2319 = vmand %vm1971, %vm2191
    %vm2320 = vmand %vm1972, %vm2192
    %vm2321 = vmand %vm1973, %vm2193
    %vm2322 = vmand %vm1974, %vm2194
    %vm2323 = vmand %vm1975, %vm2195
    %vm2324 = vmand %vm1976, %vm2196
    %vm2325 = vmand %vm1977, %vm2197
    %vm2326 = vmand %vm1978, %vm2198
    %vm2327 = vmand %vm1979, %vm2199
    %vm2328 = vmand %vm1980, %vm2200
    %vm2329 = vmand %vm1981, %vm2201
    %vm2330 = vmand %vm1982, %vm2202
    %vm2331 = vmand %vm1983, %vm2203
    %vm2332 = vmand %vm1984, %vm2204
    %vm2333 = vmand %vm1985, %vm2205
    %vm2334 = vmand %vm1986, %vm2206
    %vm2335 = vmand %vm1987, %vm2207
    %vm2336 = vmand %vm1988, %vm2208
    %vm2337 = vmand %vm1989, %vm2209
    %vm2338 = vmand %vm1990, %vm2210
    %vm2339 = vmand %vm1991, %vm2211
    %vm2340 = vmand %vm1992, %vm2212
    %vm2341 = vmand %vm1993, %vm2213
    %vm2342 = vmand %vm1994, %vm2214
    %vm2343 = vmand %vm1995, %vm2215
    %vm2344 = vmand %vm1996, %vm2216
    %vm2345 = vmand %vm1997, %vm2217
    %vm2346 = vmand %vm1998, %vm2218
    %vm2347 = vmand %vm1999, %vm2219
    %vm2348 = vmand %vm2000, %vm2220
    %vm2349 = vmand %vm2001, %vm2221
    %vm2350 = vmand %vm2002, %vm2222
    %vm2351 = vmand %vm2003, %vm2223
    %vm2352 = vmand %vm2004, %vm2224
    %vm2353 = vmand %vm2005, %vm2225
    %vm2354 = vmand %vm2006, %vm2226
    %vm2355 = vmand %vm2007, %vm2227
    %vm2356 = vmand %vm2008, %vm2228
    %vm2357 = vmand %vm2009, %vm2229
    %vm2358 = vmand %vm2010, %vm2230
    %vm2359 = vmand %vm2011, %vm2231
    %vm2360 = vmand %vm2012, %vm2232
    %vm2361 = vmand %vm2013, %vm2233
    %vm2362 = vmand %vm2014, %vm2234
    %vm2363 = vmand %vm2015, %vm2235
    %vm2364 = vmand %vm2016, %vm2236
    %vm2365 = vmand %vm2017, %vm2237
    %vm2366 = vmand %vm2018, %vm2238
    %vm2367 = vmand %vm2019, %vm2239
    %vm2368 = vmand %vm2020, %vm2240
    %vm2369 = vmand %vm2021, %vm2241
    %vm2370 = vmand %vm2022, %vm2242
    %vm2371 = vmand %vm2023, %vm2243
    %vm2372 = vmand %vm2024, %vm2244
    %vm2373 = vmand %vm2025, %vm2245
    %vm2374 = vmand %vm2026, %vm2246
    %vm2375 = vmand %vm2027, %vm2247
    %vm2376 = vmand %vm2028, %vm2248
    %vm2377 = vmand %vm2029, %vm2249
    %vm2378 = vmand %vm2030, %vm2250
    %vm2379 = vmand %vm2031, %vm2251
    %vm2380 = vmand %vm2032, %vm2252
    %vm2381 = vmand %vm2033, %vm2253
    %vm2382 = vmand %vm2034, %vm2254
    %vm2383 = vmand %vm2035, %vm2255
    %vm2384 = vmand %vm2036, %vm2256
    %vm2385 = vmand %vm2037, %vm2257
    %vm2386 = vmand %vm2038, %vm2258
    %vm2387 = vmand %vm2039, %vm2259
    %vm2388 = vmand %vm2040, %vm2260
    %vm2389 = vmand %vm2041, %vm2261
    %vm2390 = vmand %vm2042, %vm2262
    %vm2391 = vmand %vm2043, %vm2263
    %vm2392 = vmand %vm2044, %vm2264
    %vm2393 = vmand %vm2045, %vm2265
    %vm2394 = vmand %vm2046, %vm2266
    %vm2395 = vmand %vm2047, %vm2267
    %vm2396 = vmand %vm2048, %vm2268
    %vm2397 = vmand %vm2049, %vm2269
    %vm2398 = vmand %vm2050, %vm2270
    %vm2399 = vmand %vm2051, %vm2271
    %vm2400 = vmand %vm2052, %vm2272
    %vm2401 = vmand %vm2053, %vm2273
    %vm2402 = vmand %vm2054, %vm2274
    %vm2403 = vmand %vm2055, %vm2275
    %vm2404 = vmand %vm2056, %vm2276
    %vm2405 = vmand %vm2057, %vm2277
    %vm2406 = vmand %vm2058, %vm2278
    %vm2407 = vmand %vm2059, %vm2279
    %vm2408 = vmand %vm2060, %vm2280
    %vm2409 = vmand %vm2061, %vm2281
    %vm2410 = vmand %vm2062, %vm2282
    %vm2411 = vmand %vm2063, %vm2283
    %vm2412 = vmand %vm2064, %vm2284
    %vm2413 = vmand %vm2065, %vm2285
    %vm2414 = vmand %vm2066, %vm2286
    %vm2415 = vmand %vm2067, %vm2287
    %vm2416 = vmand %vm2068, %vm2288
    %vm2417 = vmand %vm2069, %vm2289
    %vm2418 = vmand %vm2070, %vm2290
    %vm2419 = vmand %vm2071, %vm2291
    %vm2420 = vmand %vm2072, %vm2292
    %vm2421 = vmand %vm2073, %vm2293
    %vm2422 = vmand %vm2074, %vm2294
    %vm2423 = vmand %vm2075, %vm2295
    %vm2424 = vmand %vm2076, %vm2296
    %vm2425 = vmand %vm2077, %vm2297
    %vm2426 = vmand %vm2078, %vm2298
    %vm2427 = vmand %vm2079, %vm2299
    %vm2428 = vmand %vm2080, %vm2300
    %vm2429 = vmand %vm2081, %vm2301
    %vm2430 = vmand %vm2082, %vm2302
    %vm2431 = vmand %vm2083, %vm2303
    %vm2432 = vmand %vm2084, %vm2304
    %vm2433 = vmand %vm2085, %vm2305
    %v2434 = vsel %vm2306, %v2095, 0
    %v2435 = vsel %vm2307, %v2096, 0
    %v2436 = vsel %vm2308, %v2097, 0
    %v2437 = vsel %vm2309, %v2098, 0
    %v2438 = vsel %vm2310, %v2095, 0
    %v2439 = vsel %vm2311, %v2096, 0
    %v2440 = vsel %vm2312, %v2097, 0
    %v2441 = vsel %vm2313, %v2098, 0
    %v2442 = vsel %vm2314, %v2095, 0
    %v2443 = vsel %vm2315, %v2096, 0
    %v2444 = vsel %vm2316, %v2097, 0
    %v2445 = vsel %vm2317, %v2098, 0
    %v2446 = vsel %vm2318, %v2095, 0
    %v2447 = vsel %vm2319, %v2096, 0
    %v2448 = vsel %vm2320, %v2097, 0
    %v2449 = vsel %vm2321, %v2098, 0
    %v2450 = vsel %vm2322, %v2095, 0
    %v2451 = vsel %vm2323, %v2096, 0
    %v2452 = vsel %vm2324, %v2097, 0
    %v2453 = vsel %vm2325, %v2098, 0
    %v2454 = vsel %vm2326, %v2095, 0
    %v2455 = vsel %vm2327, %v2096, 0
    %v2456 = vsel %vm2328, %v2097, 0
    %v2457 = vsel %vm2329, %v2098, 0
    %v2458 = vsel %vm2330, %v2095, 0
    %v2459 = vsel %vm2331, %v2096, 0
    %v2460 = vsel %vm2332, %v2097, 0
    %v2461 = vsel %vm2333, %v2098, 0
    %v2462 = vsel %vm2334, %v2095, 0
    %v2463 = vsel %vm2335, %v2096, 0
    %v2464 = vsel %vm2336, %v2097, 0
    %v2465 = vsel %vm2337, %v2098, 0
    %v2466 = vsel %vm2338, %v2095, 0
    %v2467 = vsel %vm2339, %v2096, 0
    %v2468 = vsel %vm2340, %v2097, 0
    %v2469 = vsel %vm2341, %v2098, 0
    %v2470 = vsel %vm2342, %v2095, 0
    %v2471 = vsel %vm2343, %v2096, 0
    %v2472 = vsel %vm2344, %v2097, 0
    %v2473 = vsel %vm2345, %v2098, 0
    %v2474 = vsel %vm2346, %v2095, 0
    %v2475 = vsel %vm2347, %v2096, 0
    %v2476 = vsel %vm2348, %v2097, 0
    %v2477 = vsel %vm2349, %v2098, 0
    %v2478 = vsel %vm2350, %v2095, 0
    %v2479 = vsel %vm2351, %v2096, 0
    %v2480 = vsel %vm2352, %v2097, 0
    %v2481 = vsel %vm2353, %v2098, 0
    %v2482 = vsel %vm2354, %v2095, 0
    %v2483 = vsel %vm2355, %v2096, 0
    %v2484 = vsel %vm2356, %v2097, 0
    %v2485 = vsel %vm2357, %v2098, 0
    %v2486 = vsel %vm2358, %v2095, 0
    %v2487 = vsel %vm2359, %v2096, 0
    %v2488 = vsel %vm2360, %v2097, 0
    %v2489 = vsel %vm2361, %v2098, 0
    %v2490 = vsel %vm2362, %v2095, 0
    %v2491 = vsel %vm2363, %v2096, 0
    %v2492 = vsel %vm2364, %v2097, 0
    %v2493 = vsel %vm2365, %v2098, 0
    %v2494 = vsel %vm2366, %v2095, 0
    %v2495 = vsel %vm2367, %v2096, 0
    %v2496 = vsel %vm2368, %v2097, 0
    %v2497 = vsel %vm2369, %v2098, 0
    %v2498 = vsel %vm2370, %v2095, 0
    %v2499 = vsel %vm2371, %v2096, 0
    %v2500 = vsel %vm2372, %v2097, 0
    %v2501 = vsel %vm2373, %v2098, 0
    %v2502 = vsel %vm2374, %v2095, 0
    %v2503 = vsel %vm2375, %v2096, 0
    %v2504 = vsel %vm2376, %v2097, 0
    %v2505 = vsel %vm2377, %v2098, 0
    %v2506 = vsel %vm2378, %v2095, 0
    %v2507 = vsel %vm2379, %v2096, 0
    %v2508 = vsel %vm2380, %v2097, 0
    %v2509 = vsel %vm2381, %v2098, 0
    %v2510 = vsel %vm2382, %v2095, 0
    %v2511 = vsel %vm2383, %v2096, 0
    %v2512 = vsel %vm2384, %v2097, 0
    %v2513 = vsel %vm2385, %v2098, 0
    %v2514 = vsel %vm2386, %v2095, 0
    %v2515 = vsel %vm2387, %v2096, 0
    %v2516 = vsel %vm2388, %v2097, 0
    %v2517 = vsel %vm2389, %v2098, 0
    %v2518 = vsel %vm2390, %v2095, 0
    %v2519 = vsel %vm2391, %v2096, 0
    %v2520 = vsel %vm2392, %v2097, 0
    %v2521 = vsel %vm2393, %v2098, 0
    %v2522 = vsel %vm2394, %v2095, 0
    %v2523 = vsel %vm2395, %v2096, 0
    %v2524 = vsel %vm2396, %v2097, 0
    %v2525 = vsel %vm2397, %v2098, 0
    %v2526 = vsel %vm2398, %v2095, 0
    %v2527 = vsel %vm2399, %v2096, 0
    %v2528 = vsel %vm2400, %v2097, 0
    %v2529 = vsel %vm2401, %v2098, 0
    %v2530 = vsel %vm2402, %v2095, 0
    %v2531 = vsel %vm2403, %v2096, 0
    %v2532 = vsel %vm2404, %v2097, 0
    %v2533 = vsel %vm2405, %v2098, 0
    %v2534 = vsel %vm2406, %v2095, 0
    %v2535 = vsel %vm2407, %v2096, 0
    %v2536 = vsel %vm2408, %v2097, 0
    %v2537 = vsel %vm2409, %v2098, 0
    %v2538 = vsel %vm2410, %v2095, 0
    %v2539 = vsel %vm2411, %v2096, 0
    %v2540 = vsel %vm2412, %v2097, 0
    %v2541 = vsel %vm2413, %v2098, 0
    %v2542 = vsel %vm2414, %v2095, 0
    %v2543 = vsel %vm2415, %v2096, 0
    %v2544 = vsel %vm2416, %v2097, 0
    %v2545 = vsel %vm2417, %v2098, 0
    %v2546 = vsel %vm2418, %v2095, 0
    %v2547 = vsel %vm2419, %v2096, 0
    %v2548 = vsel %vm2420, %v2097, 0
    %v2549 = vsel %vm2421, %v2098, 0
    %v2550 = vsel %vm2422, %v2095, 0
    %v2551 = vsel %vm2423, %v2096, 0
    %v2552 = vsel %vm2424, %v2097, 0
    %v2553 = vsel %vm2425, %v2098, 0
    %v2554 = vsel %vm2426, %v2095, 0
    %v2555 = vsel %vm2427, %v2096, 0
    %v2556 = vsel %vm2428, %v2097, 0
    %v2557 = vsel %vm2429, %v2098, 0
    %v2558 = vsel %vm2430, %v2095, 0
    %v2559 = vsel %vm2431, %v2096, 0
    %v2560 = vsel %vm2432, %v2097, 0
    %v2561 = vsel %vm2433, %v2098, 0
    %v2562 = vpack.c.b16 %v2435, %v2434
    %v2563 = vpack.c.b16 %v2437, %v2436
    %v2564 = vpack.c.b16 %v2439, %v2438
    %v2565 = vpack.c.b16 %v2441, %v2440
    %v2566 = vpack.c.b16 %v2443, %v2442
    %v2567 = vpack.c.b16 %v2445, %v2444
    %v2568 = vpack.c.b16 %v2447, %v2446
    %v2569 = vpack.c.b16 %v2449, %v2448
    %v2570 = vpack.c.b16 %v2451, %v2450
    %v2571 = vpack.c.b16 %v2453, %v2452
    %v2572 = vpack.c.b16 %v2455, %v2454
    %v2573 = vpack.c.b16 %v2457, %v2456
    %v2574 = vpack.c.b16 %v2459, %v2458
    %v2575 = vpack.c.b16 %v2461, %v2460
    %v2576 = vpack.c.b16 %v2463, %v2462
    %v2577 = vpack.c.b16 %v2465, %v2464
    %v2578 = vpack.c.b16 %v2467, %v2466
    %v2579 = vpack.c.b16 %v2469, %v2468
    %v2580 = vpack.c.b16 %v2471, %v2470
    %v2581 = vpack.c.b16 %v2473, %v2472
    %v2582 = vpack.c.b16 %v2475, %v2474
    %v2583 = vpack.c.b16 %v2477, %v2476
    %v2584 = vpack.c.b16 %v2479, %v2478
    %v2585 = vpack.c.b16 %v2481, %v2480
    %v2586 = vpack.c.b16 %v2483, %v2482
    %v2587 = vpack.c.b16 %v2485, %v2484
    %v2588 = vpack.c.b16 %v2487, %v2486
    %v2589 = vpack.c.b16 %v2489, %v2488
    %v2590 = vpack.c.b16 %v2491, %v2490
    %v2591 = vpack.c.b16 %v2493, %v2492
    %v2592 = vpack.c.b16 %v2495, %v2494
    %v2593 = vpack.c.b16 %v2497, %v2496
    %v2594 = vpack.c.b16 %v2499, %v2498
    %v2595 = vpack.c.b16 %v2501, %v2500
    %v2596 = vpack.c.b16 %v2503, %v2502
    %v2597 = vpack.c.b16 %v2505, %v2504
    %v2598 = vpack.c.b16 %v2507, %v2506
    %v2599 = vpack.c.b16 %v2509, %v2508
    %v2600 = vpack.c.b16 %v2511, %v2510
    %v2601 = vpack.c.b16 %v2513, %v2512
    %v2602 = vpack.c.b16 %v2515, %v2514
    %v2603 = vpack.c.b16 %v2517, %v2516
    %v2604 = vpack.c.b16 %v2519, %v2518
    %v2605 = vpack.c.b16 %v2521, %v2520
    %v2606 = vpack.c.b16 %v2523, %v2522
    %v2607 = vpack.c.b16 %v2525, %v2524
    %v2608 = vpack.c.b16 %v2527, %v2526
    %v2609 = vpack.c.b16 %v2529, %v2528
    %v2610 = vpack.c.b16 %v2531, %v2530
    %v2611 = vpack.c.b16 %v2533, %v2532
    %v2612 = vpack.c.b16 %v2535, %v2534
    %v2613 = vpack.c.b16 %v2537, %v2536
    %v2614 = vpack.c.b16 %v2539, %v2538
    %v2615 = vpack.c.b16 %v2541, %v2540
    %v2616 = vpack.c.b16 %v2543, %v2542
    %v2617 = vpack.c.b16 %v2545, %v2544
    %v2618 = vpack.c.b16 %v2547, %v2546
    %v2619 = vpack.c.b16 %v2549, %v2548
    %v2620 = vpack.c.b16 %v2551, %v2550
    %v2621 = vpack.c.b16 %v2553, %v2552
    %v2622 = vpack.c.b16 %v2555, %v2554
    %v2623 = vpack.c.b16 %v2557, %v2556
    %v2624 = vpack.c.b16 %v2559, %v2558
    %v2625 = vpack.c.b16 %v2561, %v2560
    %2626 = vst [vmem:[%s2] sm:$0xff] %v2562
    %2627 = vst [vmem:[%s2 + $0x8] sm:$0xff] %v2563
    %2628 = vst [vmem:[%s2 + $0x10] sm:$0xff] %v2564
    %2629 = vst [vmem:[%s2 + $0x18] sm:$0xff] %v2565
    %2630 = vst [vmem:[%s2 + $0x20] sm:$0xff] %v2566
    %2631 = vst [vmem:[%s2 + $0x28] sm:$0xff] %v2567
    %2632 = vst [vmem:[%s2 + $0x30] sm:$0xff] %v2568
    %2633 = vst [vmem:[%s2 + $0x38] sm:$0xff] %v2569
    %2634 = vst [vmem:[%s2 + $0x40] sm:$0xff] %v2570
    %2635 = vst [vmem:[%s2 + $0x48] sm:$0xff] %v2571
    %2636 = vst [vmem:[%s2 + $0x50] sm:$0xff] %v2572
    %2637 = vst [vmem:[%s2 + $0x58] sm:$0xff] %v2573
    %2638 = vst [vmem:[%s2 + $0x60] sm:$0xff] %v2574
    %2639 = vst [vmem:[%s2 + $0x68] sm:$0xff] %v2575
    %2640 = vst [vmem:[%s2 + $0x70] sm:$0xff] %v2576
    %2641 = vst [vmem:[%s2 + $0x78] sm:$0xff] %v2577
    %2642 = vst [vmem:[%s2 + $0x80] sm:$0xff] %v2578
    %2643 = vst [vmem:[%s2 + $0x88] sm:$0xff] %v2579
    %2644 = vst [vmem:[%s2 + $0x90] sm:$0xff] %v2580
    %2645 = vst [vmem:[%s2 + $0x98] sm:$0xff] %v2581
    %2646 = vst [vmem:[%s2 + $0xa0] sm:$0xff] %v2582
    %2647 = vst [vmem:[%s2 + $0xa8] sm:$0xff] %v2583
    %2648 = vst [vmem:[%s2 + $0xb0] sm:$0xff] %v2584
    %2649 = vst [vmem:[%s2 + $0xb8] sm:$0xff] %v2585
    %2650 = vst [vmem:[%s2 + $0xc0] sm:$0xff] %v2586
    %2651 = vst [vmem:[%s2 + $0xc8] sm:$0xff] %v2587
    %2652 = vst [vmem:[%s2 + $0xd0] sm:$0xff] %v2588
    %2653 = vst [vmem:[%s2 + $0xd8] sm:$0xff] %v2589
    %2654 = vst [vmem:[%s2 + $0xe0] sm:$0xff] %v2590
    %2655 = vst [vmem:[%s2 + $0xe8] sm:$0xff] %v2591
    %2656 = vst [vmem:[%s2 + $0xf0] sm:$0xff] %v2592
    %2657 = vst [vmem:[%s2 + $0xf8] sm:$0xff] %v2593
    %2658 = vst [vmem:[%s2 + $0x100] sm:$0xff] %v2594
    %2659 = vst [vmem:[%s2 + $0x108] sm:$0xff] %v2595
    %2660 = vst [vmem:[%s2 + $0x110] sm:$0xff] %v2596
    %2661 = vst [vmem:[%s2 + $0x118] sm:$0xff] %v2597
    %2662 = vst [vmem:[%s2 + $0x120] sm:$0xff] %v2598
    %2663 = vst [vmem:[%s2 + $0x128] sm:$0xff] %v2599
    %2664 = vst [vmem:[%s2 + $0x130] sm:$0xff] %v2600
    %2665 = vst [vmem:[%s2 + $0x138] sm:$0xff] %v2601
    %2666 = vst [vmem:[%s2 + $0x140] sm:$0xff] %v2602
    %2667 = vst [vmem:[%s2 + $0x148] sm:$0xff] %v2603
    %2668 = vst [vmem:[%s2 + $0x150] sm:$0xff] %v2604
    %2669 = vst [vmem:[%s2 + $0x158] sm:$0xff] %v2605
    %2670 = vst [vmem:[%s2 + $0x160] sm:$0xff] %v2606
    %2671 = vst [vmem:[%s2 + $0x168] sm:$0xff] %v2607
    %2672 = vst [vmem:[%s2 + $0x170] sm:$0xff] %v2608
    %2673 = vst [vmem:[%s2 + $0x178] sm:$0xff] %v2609
    %2674 = vst [vmem:[%s2 + $0x180] sm:$0xff] %v2610
    %2675 = vst [vmem:[%s2 + $0x188] sm:$0xff] %v2611
    %2676 = vst [vmem:[%s2 + $0x190] sm:$0xff] %v2612
    %2677 = vst [vmem:[%s2 + $0x198] sm:$0xff] %v2613
    %2678 = vst [vmem:[%s2 + $0x1a0] sm:$0xff] %v2614
    %2679 = vst [vmem:[%s2 + $0x1a8] sm:$0xff] %v2615
    %2680 = vst [vmem:[%s2 + $0x1b0] sm:$0xff] %v2616
    %2681 = vst [vmem:[%s2 + $0x1b8] sm:$0xff] %v2617
    %2682 = vst [vmem:[%s2 + $0x1c0] sm:$0xff] %v2618
    %2683 = vst [vmem:[%s2 + $0x1c8] sm:$0xff] %v2619
    %2684 = vst [vmem:[%s2 + $0x1d0] sm:$0xff] %v2620
    %2685 = vst [vmem:[%s2 + $0x1d8] sm:$0xff] %v2621
    %2686 = vst [vmem:[%s2 + $0x1e0] sm:$0xff] %v2622
    %2687 = vst [vmem:[%s2 + $0x1e8] sm:$0xff] %v2623
    %2688 = vst [vmem:[%s2 + $0x1f0] sm:$0xff] %v2624
    %2689 = vst [vmem:[%s2 + $0x1f8] sm:$0xff] %v2625
  $region13: #{radius_interaction_graph.1} parent=0 // pred_fallthru
    _
  %p2690 = pneg %p2104
  // Predicated region
  $region14: #{radius_interaction_graph.1} parent=0 // pred_check
    _
  $region15: #{radius_interaction_graph.1} parent=0 // pred_check_branch
    %2692 = sbr.rel (%p2104) target = $region17
  $region16: #{radius_interaction_graph.1} parent=0 // pred_region
    %v2693 = vsel %vm1958, %v2095, 0
    %v2694 = vsel %vm1959, %v2096, 0
    %v2695 = vsel %vm1960, %v2097, 0
    %v2696 = vsel %vm1961, %v2098, 0
    %v2697 = vsel %vm1962, %v2095, 0
    %v2698 = vsel %vm1963, %v2096, 0
    %v2699 = vsel %vm1964, %v2097, 0
    %v2700 = vsel %vm1965, %v2098, 0
    %v2701 = vsel %vm1966, %v2095, 0
    %v2702 = vsel %vm1967, %v2096, 0
    %v2703 = vsel %vm1968, %v2097, 0
    %v2704 = vsel %vm1969, %v2098, 0
    %v2705 = vsel %vm1970, %v2095, 0
    %v2706 = vsel %vm1971, %v2096, 0
    %v2707 = vsel %vm1972, %v2097, 0
    %v2708 = vsel %vm1973, %v2098, 0
    %v2709 = vsel %vm1974, %v2095, 0
    %v2710 = vsel %vm1975, %v2096, 0
    %v2711 = vsel %vm1976, %v2097, 0
    %v2712 = vsel %vm1977, %v2098, 0
    %v2713 = vsel %vm1978, %v2095, 0
    %v2714 = vsel %vm1979, %v2096, 0
    %v2715 = vsel %vm1980, %v2097, 0
    %v2716 = vsel %vm1981, %v2098, 0
    %v2717 = vsel %vm1982, %v2095, 0
    %v2718 = vsel %vm1983, %v2096, 0
    %v2719 = vsel %vm1984, %v2097, 0
    %v2720 = vsel %vm1985, %v2098, 0
    %v2721 = vsel %vm1986, %v2095, 0
    %v2722 = vsel %vm1987, %v2096, 0
    %v2723 = vsel %vm1988, %v2097, 0
    %v2724 = vsel %vm1989, %v2098, 0
    %v2725 = vsel %vm1990, %v2095, 0
    %v2726 = vsel %vm1991, %v2096, 0
    %v2727 = vsel %vm1992, %v2097, 0
    %v2728 = vsel %vm1993, %v2098, 0
    %v2729 = vsel %vm1994, %v2095, 0
    %v2730 = vsel %vm1995, %v2096, 0
    %v2731 = vsel %vm1996, %v2097, 0
    %v2732 = vsel %vm1997, %v2098, 0
    %v2733 = vsel %vm1998, %v2095, 0
    %v2734 = vsel %vm1999, %v2096, 0
    %v2735 = vsel %vm2000, %v2097, 0
    %v2736 = vsel %vm2001, %v2098, 0
    %v2737 = vsel %vm2002, %v2095, 0
    %v2738 = vsel %vm2003, %v2096, 0
    %v2739 = vsel %vm2004, %v2097, 0
    %v2740 = vsel %vm2005, %v2098, 0
    %v2741 = vsel %vm2006, %v2095, 0
    %v2742 = vsel %vm2007, %v2096, 0
    %v2743 = vsel %vm2008, %v2097, 0
    %v2744 = vsel %vm2009, %v2098, 0
    %v2745 = vsel %vm2010, %v2095, 0
    %v2746 = vsel %vm2011, %v2096, 0
    %v2747 = vsel %vm2012, %v2097, 0
    %v2748 = vsel %vm2013, %v2098, 0
    %v2749 = vsel %vm2014, %v2095, 0
    %v2750 = vsel %vm2015, %v2096, 0
    %v2751 = vsel %vm2016, %v2097, 0
    %v2752 = vsel %vm2017, %v2098, 0
    %v2753 = vsel %vm2018, %v2095, 0
    %v2754 = vsel %vm2019, %v2096, 0
    %v2755 = vsel %vm2020, %v2097, 0
    %v2756 = vsel %vm2021, %v2098, 0
    %v2757 = vsel %vm2022, %v2095, 0
    %v2758 = vsel %vm2023, %v2096, 0
    %v2759 = vsel %vm2024, %v2097, 0
    %v2760 = vsel %vm2025, %v2098, 0
    %v2761 = vsel %vm2026, %v2095, 0
    %v2762 = vsel %vm2027, %v2096, 0
    %v2763 = vsel %vm2028, %v2097, 0
    %v2764 = vsel %vm2029, %v2098, 0
    %v2765 = vsel %vm2030, %v2095, 0
    %v2766 = vsel %vm2031, %v2096, 0
    %v2767 = vsel %vm2032, %v2097, 0
    %v2768 = vsel %vm2033, %v2098, 0
    %v2769 = vsel %vm2034, %v2095, 0
    %v2770 = vsel %vm2035, %v2096, 0
    %v2771 = vsel %vm2036, %v2097, 0
    %v2772 = vsel %vm2037, %v2098, 0
    %v2773 = vsel %vm2038, %v2095, 0
    %v2774 = vsel %vm2039, %v2096, 0
    %v2775 = vsel %vm2040, %v2097, 0
    %v2776 = vsel %vm2041, %v2098, 0
    %v2777 = vsel %vm2042, %v2095, 0
    %v2778 = vsel %vm2043, %v2096, 0
    %v2779 = vsel %vm2044, %v2097, 0
    %v2780 = vsel %vm2045, %v2098, 0
    %v2781 = vsel %vm2046, %v2095, 0
    %v2782 = vsel %vm2047, %v2096, 0
    %v2783 = vsel %vm2048, %v2097, 0
    %v2784 = vsel %vm2049, %v2098, 0
    %v2785 = vsel %vm2050, %v2095, 0
    %v2786 = vsel %vm2051, %v2096, 0
    %v2787 = vsel %vm2052, %v2097, 0
    %v2788 = vsel %vm2053, %v2098, 0
    %v2789 = vsel %vm2054, %v2095, 0
    %v2790 = vsel %vm2055, %v2096, 0
    %v2791 = vsel %vm2056, %v2097, 0
    %v2792 = vsel %vm2057, %v2098, 0
    %v2793 = vsel %vm2058, %v2095, 0
    %v2794 = vsel %vm2059, %v2096, 0
    %v2795 = vsel %vm2060, %v2097, 0
    %v2796 = vsel %vm2061, %v2098, 0
    %v2797 = vsel %vm2062, %v2095, 0
    %v2798 = vsel %vm2063, %v2096, 0
    %v2799 = vsel %vm2064, %v2097, 0
    %v2800 = vsel %vm2065, %v2098, 0
    %v2801 = vsel %vm2066, %v2095, 0
    %v2802 = vsel %vm2067, %v2096, 0
    %v2803 = vsel %vm2068, %v2097, 0
    %v2804 = vsel %vm2069, %v2098, 0
    %v2805 = vsel %vm2070, %v2095, 0
    %v2806 = vsel %vm2071, %v2096, 0
    %v2807 = vsel %vm2072, %v2097, 0
    %v2808 = vsel %vm2073, %v2098, 0
    %v2809 = vsel %vm2074, %v2095, 0
    %v2810 = vsel %vm2075, %v2096, 0
    %v2811 = vsel %vm2076, %v2097, 0
    %v2812 = vsel %vm2077, %v2098, 0
    %v2813 = vsel %vm2078, %v2095, 0
    %v2814 = vsel %vm2079, %v2096, 0
    %v2815 = vsel %vm2080, %v2097, 0
    %v2816 = vsel %vm2081, %v2098, 0
    %v2817 = vsel %vm2082, %v2095, 0
    %v2818 = vsel %vm2083, %v2096, 0
    %v2819 = vsel %vm2084, %v2097, 0
    %v2820 = vsel %vm2085, %v2098, 0
    %v2821 = vpack.c.b16 %v2694, %v2693
    %v2822 = vpack.c.b16 %v2696, %v2695
    %v2823 = vpack.c.b16 %v2698, %v2697
    %v2824 = vpack.c.b16 %v2700, %v2699
    %v2825 = vpack.c.b16 %v2702, %v2701
    %v2826 = vpack.c.b16 %v2704, %v2703
    %v2827 = vpack.c.b16 %v2706, %v2705
    %v2828 = vpack.c.b16 %v2708, %v2707
    %v2829 = vpack.c.b16 %v2710, %v2709
    %v2830 = vpack.c.b16 %v2712, %v2711
    %v2831 = vpack.c.b16 %v2714, %v2713
    %v2832 = vpack.c.b16 %v2716, %v2715
    %v2833 = vpack.c.b16 %v2718, %v2717
    %v2834 = vpack.c.b16 %v2720, %v2719
    %v2835 = vpack.c.b16 %v2722, %v2721
    %v2836 = vpack.c.b16 %v2724, %v2723
    %v2837 = vpack.c.b16 %v2726, %v2725
    %v2838 = vpack.c.b16 %v2728, %v2727
    %v2839 = vpack.c.b16 %v2730, %v2729
    %v2840 = vpack.c.b16 %v2732, %v2731
    %v2841 = vpack.c.b16 %v2734, %v2733
    %v2842 = vpack.c.b16 %v2736, %v2735
    %v2843 = vpack.c.b16 %v2738, %v2737
    %v2844 = vpack.c.b16 %v2740, %v2739
    %v2845 = vpack.c.b16 %v2742, %v2741
    %v2846 = vpack.c.b16 %v2744, %v2743
    %v2847 = vpack.c.b16 %v2746, %v2745
    %v2848 = vpack.c.b16 %v2748, %v2747
    %v2849 = vpack.c.b16 %v2750, %v2749
    %v2850 = vpack.c.b16 %v2752, %v2751
    %v2851 = vpack.c.b16 %v2754, %v2753
    %v2852 = vpack.c.b16 %v2756, %v2755
    %v2853 = vpack.c.b16 %v2758, %v2757
    %v2854 = vpack.c.b16 %v2760, %v2759
    %v2855 = vpack.c.b16 %v2762, %v2761
    %v2856 = vpack.c.b16 %v2764, %v2763
    %v2857 = vpack.c.b16 %v2766, %v2765
    %v2858 = vpack.c.b16 %v2768, %v2767
    %v2859 = vpack.c.b16 %v2770, %v2769
    %v2860 = vpack.c.b16 %v2772, %v2771
    %v2861 = vpack.c.b16 %v2774, %v2773
    %v2862 = vpack.c.b16 %v2776, %v2775
    %v2863 = vpack.c.b16 %v2778, %v2777
    %v2864 = vpack.c.b16 %v2780, %v2779
    %v2865 = vpack.c.b16 %v2782, %v2781
    %v2866 = vpack.c.b16 %v2784, %v2783
    %v2867 = vpack.c.b16 %v2786, %v2785
    %v2868 = vpack.c.b16 %v2788, %v2787
    %v2869 = vpack.c.b16 %v2790, %v2789
    %v2870 = vpack.c.b16 %v2792, %v2791
    %v2871 = vpack.c.b16 %v2794, %v2793
    %v2872 = vpack.c.b16 %v2796, %v2795
    %v2873 = vpack.c.b16 %v2798, %v2797
    %v2874 = vpack.c.b16 %v2800, %v2799
    %v2875 = vpack.c.b16 %v2802, %v2801
    %v2876 = vpack.c.b16 %v2804, %v2803
    %v2877 = vpack.c.b16 %v2806, %v2805
    %v2878 = vpack.c.b16 %v2808, %v2807
    %v2879 = vpack.c.b16 %v2810, %v2809
    %v2880 = vpack.c.b16 %v2812, %v2811
    %v2881 = vpack.c.b16 %v2814, %v2813
    %v2882 = vpack.c.b16 %v2816, %v2815
    %v2883 = vpack.c.b16 %v2818, %v2817
    %v2884 = vpack.c.b16 %v2820, %v2819
    %2885 = vst [vmem:[%s2] sm:$0xff] %v2821
    %2886 = vst [vmem:[%s2 + $0x8] sm:$0xff] %v2822
    %2887 = vst [vmem:[%s2 + $0x10] sm:$0xff] %v2823
    %2888 = vst [vmem:[%s2 + $0x18] sm:$0xff] %v2824
    %2889 = vst [vmem:[%s2 + $0x20] sm:$0xff] %v2825
    %2890 = vst [vmem:[%s2 + $0x28] sm:$0xff] %v2826
    %2891 = vst [vmem:[%s2 + $0x30] sm:$0xff] %v2827
    %2892 = vst [vmem:[%s2 + $0x38] sm:$0xff] %v2828
    %2893 = vst [vmem:[%s2 + $0x40] sm:$0xff] %v2829
    %2894 = vst [vmem:[%s2 + $0x48] sm:$0xff] %v2830
    %2895 = vst [vmem:[%s2 + $0x50] sm:$0xff] %v2831
    %2896 = vst [vmem:[%s2 + $0x58] sm:$0xff] %v2832
    %2897 = vst [vmem:[%s2 + $0x60] sm:$0xff] %v2833
    %2898 = vst [vmem:[%s2 + $0x68] sm:$0xff] %v2834
    %2899 = vst [vmem:[%s2 + $0x70] sm:$0xff] %v2835
    %2900 = vst [vmem:[%s2 + $0x78] sm:$0xff] %v2836
    %2901 = vst [vmem:[%s2 + $0x80] sm:$0xff] %v2837
    %2902 = vst [vmem:[%s2 + $0x88] sm:$0xff] %v2838
    %2903 = vst [vmem:[%s2 + $0x90] sm:$0xff] %v2839
    %2904 = vst [vmem:[%s2 + $0x98] sm:$0xff] %v2840
    %2905 = vst [vmem:[%s2 + $0xa0] sm:$0xff] %v2841
    %2906 = vst [vmem:[%s2 + $0xa8] sm:$0xff] %v2842
    %2907 = vst [vmem:[%s2 + $0xb0] sm:$0xff] %v2843
    %2908 = vst [vmem:[%s2 + $0xb8] sm:$0xff] %v2844
    %2909 = vst [vmem:[%s2 + $0xc0] sm:$0xff] %v2845
    %2910 = vst [vmem:[%s2 + $0xc8] sm:$0xff] %v2846
    %2911 = vst [vmem:[%s2 + $0xd0] sm:$0xff] %v2847
    %2912 = vst [vmem:[%s2 + $0xd8] sm:$0xff] %v2848
    %2913 = vst [vmem:[%s2 + $0xe0] sm:$0xff] %v2849
    %2914 = vst [vmem:[%s2 + $0xe8] sm:$0xff] %v2850
    %2915 = vst [vmem:[%s2 + $0xf0] sm:$0xff] %v2851
    %2916 = vst [vmem:[%s2 + $0xf8] sm:$0xff] %v2852
    %2917 = vst [vmem:[%s2 + $0x100] sm:$0xff] %v2853
    %2918 = vst [vmem:[%s2 + $0x108] sm:$0xff] %v2854
    %2919 = vst [vmem:[%s2 + $0x110] sm:$0xff] %v2855
    %2920 = vst [vmem:[%s2 + $0x118] sm:$0xff] %v2856
    %2921 = vst [vmem:[%s2 + $0x120] sm:$0xff] %v2857
    %2922 = vst [vmem:[%s2 + $0x128] sm:$0xff] %v2858
    %2923 = vst [vmem:[%s2 + $0x130] sm:$0xff] %v2859
    %2924 = vst [vmem:[%s2 + $0x138] sm:$0xff] %v2860
    %2925 = vst [vmem:[%s2 + $0x140] sm:$0xff] %v2861
    %2926 = vst [vmem:[%s2 + $0x148] sm:$0xff] %v2862
    %2927 = vst [vmem:[%s2 + $0x150] sm:$0xff] %v2863
    %2928 = vst [vmem:[%s2 + $0x158] sm:$0xff] %v2864
    %2929 = vst [vmem:[%s2 + $0x160] sm:$0xff] %v2865
    %2930 = vst [vmem:[%s2 + $0x168] sm:$0xff] %v2866
    %2931 = vst [vmem:[%s2 + $0x170] sm:$0xff] %v2867
    %2932 = vst [vmem:[%s2 + $0x178] sm:$0xff] %v2868
    %2933 = vst [vmem:[%s2 + $0x180] sm:$0xff] %v2869
    %2934 = vst [vmem:[%s2 + $0x188] sm:$0xff] %v2870
    %2935 = vst [vmem:[%s2 + $0x190] sm:$0xff] %v2871
    %2936 = vst [vmem:[%s2 + $0x198] sm:$0xff] %v2872
    %2937 = vst [vmem:[%s2 + $0x1a0] sm:$0xff] %v2873
    %2938 = vst [vmem:[%s2 + $0x1a8] sm:$0xff] %v2874
    %2939 = vst [vmem:[%s2 + $0x1b0] sm:$0xff] %v2875
    %2940 = vst [vmem:[%s2 + $0x1b8] sm:$0xff] %v2876
    %2941 = vst [vmem:[%s2 + $0x1c0] sm:$0xff] %v2877
    %2942 = vst [vmem:[%s2 + $0x1c8] sm:$0xff] %v2878
    %2943 = vst [vmem:[%s2 + $0x1d0] sm:$0xff] %v2879
    %2944 = vst [vmem:[%s2 + $0x1d8] sm:$0xff] %v2880
    %2945 = vst [vmem:[%s2 + $0x1e0] sm:$0xff] %v2881
    %2946 = vst [vmem:[%s2 + $0x1e8] sm:$0xff] %v2882
    %2947 = vst [vmem:[%s2 + $0x1f0] sm:$0xff] %v2883
    %2948 = vst [vmem:[%s2 + $0x1f8] sm:$0xff] %v2884
  $region17: #{radius_interaction_graph.1} parent=0 // pred_fallthru
    _
  // Predicated region
  $region18: #{radius_interaction_graph.1} parent=0 // pred_check
    _
  $region19: #{radius_interaction_graph.1} parent=0 // pred_check_branch
    %2950 = sbr.rel (0) target = $region21
  $region20: #{radius_interaction_graph.1} parent=0 // pred_region
    _
  $region21: #{radius_interaction_graph.1} parent=0 // pred_fallthru
    _
  // Predicated region
  $region22: #{radius_interaction_graph.1} parent=0 // pred_check
    _
  $region23: #{radius_interaction_graph.1} parent=0 // pred_check_branch
    %2952 = sbr.rel (0) target = $region25
  $region24: #{radius_interaction_graph.1} parent=0 // pred_region
    _
  $region25: #{radius_interaction_graph.1} parent=0 // pred_fallthru
    _

</llo_original>
